<compile_context>
chip_gen: v7x
topology: tpu7x:2x2x1
jax: 0.10.0
libtpu: 0.0.40
codegen_flags: <defaults>
</compile_context>

<pallas_src>
import functools

import jax
import jax.numpy as jnp
import numpy as np
from jax.experimental import pallas as pl
from jax.experimental.pallas import tpu as pltpu


def _round_up(x, m):
    return ((x + m - 1) // m) * m


def _head_kernel(sentf_ref, posf_ref, docf_ref, w1bd_ref, b1t_ref, w2s_ref,
                 b2_ref, predf_ref, *, fold, hidden_dim):
    """One folded row-tile: concat-groups -> tanh -> pre_pred -> tanh -> pred.

    Every tile is (rows, fold*H) with fold*H = 128 lanes, i.e. fully lane-dense.
    Folded row r, lane block j holds sample s = fold*r + j.
    """
    W = fold * hidden_dim

    sent = sentf_ref[...].astype(jnp.float32)
    pos = posf_ref[...].astype(jnp.float32)
    doc = docf_ref[...].astype(jnp.float32)

    # The 4-way concat [sent | pos | doc*sent | doc-sent]; tanh is elementwise,
    # so it can be applied per group (identical to tanh(concat)).
    groups = (sent, pos, doc * sent, doc - sent)

    # TODO(synk): nn.Dropout omitted (eval-mode identity).

    # pre_pred Linear(4H -> H) in folded form: each group multiplies a
    # block-diagonal (W, W) expansion of its (H, H) weight slice, so the fold
    # layout is preserved.  bf16 operands, f32 accumulation on the MXU.
    acc = None
    for k, g in enumerate(groups):
        t = jnp.tanh(g).astype(jnp.bfloat16)
        part = jnp.dot(t, w1bd_ref[k * W:(k + 1) * W, :],
                       preferred_element_type=jnp.float32)
        acc = part if acc is None else acc + part
    h = jnp.tanh(acc + b1t_ref[...])                       # (rows, W) f32

    # pred Linear(H -> 1) in folded form: (W, fold) block-column matrix gives
    # one prediction per lane block -> (rows, fold) output, 4-lane-wide stores.
    pred = jnp.dot(h, w2s_ref[...],
                   preferred_element_type=jnp.float32) + b2_ref[...]
    predf_ref[...] = pred.astype(predf_ref.dtype)


def normal_regression_sequence_head(sent, pos, doc, labels, params, *,
                                    fold=4, tile_rows=8192):
    """Returns (loss_scalar, pred reshaped to labels.shape).

    sent/pos/doc: (N, H) embeddings (bf16 recommended; any float works).
    params: (w1 (4H, H), b1 (H,), w2 (H,), b2 scalar)  [w1 already transposed
    so that h = tanh(concat) @ w1 + b1].
    """
    N, H = sent.shape
    w1, b1, w2, b2 = params
    W = fold * H

    # ---- fold `fold` consecutive samples into one lane-dense row ----
    # Row-major reshape => free (metadata only); padding only if N is ragged
    # w.r.t. the fold factor (adds <= fold-1 zero rows).
    n_pad = _round_up(N, fold)
    if n_pad != N:
        padf = lambda a: jnp.pad(a, ((0, n_pad - N), (0, 0)))
        sent, pos, doc = padf(sent), padf(pos), padf(doc)
    nf = n_pad // fold
    sentf = sent.reshape(nf, W)
    posf = pos.reshape(nf, W)
    docf = doc.reshape(nf, W)

    # ---- fold the weights (tiny one-off; in a real model do this at init) ----
    eye = jnp.eye(fold, dtype=jnp.float32)
    w1f = w1.astype(jnp.float32)
    w1bd = jnp.concatenate(
        [jnp.kron(eye, w1f[k * H:(k + 1) * H, :]) for k in range(4)],
        axis=0).astype(jnp.bfloat16)                                   # (4W, W)
    b1t = jnp.tile(b1.reshape(1, H).astype(jnp.float32), (1, fold))    # (1, W)
    w2s = jnp.kron(eye, w2.reshape(H, 1).astype(jnp.float32))          # (W, fold)
    b2m = jnp.asarray(b2, jnp.float32).reshape(1, 1)

    rows = min(tile_rows // fold, _round_up(nf, 8))
    grid = (-(-nf // rows),)

    kernel = functools.partial(_head_kernel, fold=fold, hidden_dim=H)

    flops = 2 * 4 * nf * W * W + 2 * nf * W * fold
    transcendentals = 5 * nf * W
    bytes_accessed = (3 * sentf.size * sentf.dtype.itemsize
                      + nf * fold * 4 + w1bd.size * 2
                      + (b1t.size + w2s.size + 1) * 4)

    predf = pl.pallas_call(
        kernel,
        out_shape=jax.ShapeDtypeStruct((nf, fold), jnp.float32),
        grid_spec=pltpu.PrefetchScalarGridSpec(
            num_scalar_prefetch=0,
            grid=grid,
            in_specs=[
                pl.BlockSpec((rows, W), lambda i: (i, 0)),    # sent (folded)
                pl.BlockSpec((rows, W), lambda i: (i, 0)),    # pos  (folded)
                pl.BlockSpec((rows, W), lambda i: (i, 0)),    # doc  (folded)
                pl.BlockSpec((4 * W, W), lambda i: (0, 0)),   # pre_pred block-diag W
                pl.BlockSpec((1, W), lambda i: (0, 0)),       # pre_pred bias (tiled)
                pl.BlockSpec((W, fold), lambda i: (0, 0)),    # pred block-column W
                pl.BlockSpec((1, 1), lambda i: (0, 0)),       # pred bias
            ],
            out_specs=pl.BlockSpec((rows, fold), lambda i: (i, 0)),
        ),
        compiler_params=pltpu.CompilerParams(
            # No cross-tile reduction anymore -> row tiles are independent and
            # can be sharded across v7x's two TensorCores.
            dimension_semantics=("parallel",),
            vmem_limit_bytes=40 * 1024 * 1024,
        ),
        cost_estimate=pl.CostEstimate(flops=flops,
                                      transcendentals=transcendentals,
                                      bytes_accessed=bytes_accessed),
    )(sentf, posf, docf, w1bd, b1t, w2s, b2m)

    pred = predf.reshape(n_pad)[:N].reshape(labels.shape)

    # MSELoss(reduction='none') followed by torch.mean == plain mean of squares.
    # Computed wrapper-side (negligible) so the kernel grid stays parallel.
    loss = jnp.mean((pred - labels.astype(jnp.float32)) ** 2)
    return loss, pred


def _xavier_uniform(key, shape, fan_in, fan_out):
    bound = float(np.sqrt(6.0 / (fan_in + fan_out)))
    return jax.random.uniform(key, shape, jnp.float32, minval=-bound, maxval=bound)


def _reference(sent, pos, doc, labels, params):
    """Pure-JAX f32 reference matching the PyTorch module semantics."""
    w1, b1, w2, b2 = params
    s = sent.astype(jnp.float32)
    p = pos.astype(jnp.float32)
    d = doc.astype(jnp.float32)
    concat = jnp.concatenate([s, p, d * s, d - s], axis=1)
    h = jnp.tanh(jnp.tanh(concat) @ w1.astype(jnp.float32) + b1.reshape(1, -1))
    pred = (h @ w2.reshape(-1, 1).astype(jnp.float32) + b2).reshape(labels.shape)
    loss = jnp.mean((pred - labels) ** 2)
    return loss, pred


if __name__ == "__main__":
    H = 32
    key = jax.random.PRNGKey(0)
    k_w1, k_w2, k_data = jax.random.split(key, 3)

    # PyTorch: pre_pred = Linear(4H, H) (weight (H,4H)) -> stored transposed as
    # (4H, H); pred = Linear(H, 1) -> weight stored as (H,); biases zero.
    # Weights snapped to bf16 precision so the kernel's bf16 matmul operands and
    # the f32 reference see identical values.
    w1 = _xavier_uniform(k_w1, (4 * H, H), 4 * H, H).astype(jnp.bfloat16).astype(jnp.float32)
    b1 = jnp.zeros((H,), jnp.float32)
    w2 = _xavier_uniform(k_w2, (1, H), H, 1).reshape(H)
    b2 = jnp.zeros((), jnp.float32)
    params = (w1, b1, w2, b2)

    # Case 1: ragged N (not a multiple of fold) + multiple tiles + ragged last
    #         tile (exercises the pad path and partial-block clipping).
    # Case 2: single partial tile at the default (large) tile size.
    for n, tile_rows in ((2501, 1024), (504, 8192)):
        ks, kp, kd, kl = jax.random.split(jax.random.fold_in(k_data, n), 4)
        sent = jax.random.normal(ks, (n, H), jnp.float32).astype(jnp.bfloat16)
        pos = jax.random.normal(kp, (n, H), jnp.float32).astype(jnp.bfloat16)
        doc = jax.random.normal(kd, (n, H), jnp.float32).astype(jnp.bfloat16)
        labels = jax.random.normal(kl, (n,), jnp.float32)

        loss, pred = normal_regression_sequence_head(
            sent, pos, doc, labels, params, tile_rows=tile_rows)
        jax.block_until_ready((loss, pred))

        ref_loss, ref_pred = _reference(sent, pos, doc, labels, params)
        # bf16 matmul operands (f32 accumulate) => loosened tolerance vs f32 ref.
        np.testing.assert_allclose(np.asarray(pred), np.asarray(ref_pred),
                                   rtol=2e-2, atol=2e-2)
        np.testing.assert_allclose(float(loss), float(ref_loss),
                                   rtol=2e-2, atol=2e-2)

    print("KERNEL_OK")
</pallas_src>

<mosaic_0001>
module attributes {stable_mosaic.version = 11 : i64} {
  func.func @_head_kernel(%arg0: i32, %arg1: memref<256x128xbf16, #tpu.memory_space<vmem>>, %arg2: memref<256x128xbf16, #tpu.memory_space<vmem>>, %arg3: memref<256x128xbf16, #tpu.memory_space<vmem>>, %arg4: memref<512x128xbf16, #tpu.memory_space<vmem>>, %arg5: memref<1x128xf32, #tpu.memory_space<vmem>>, %arg6: memref<128x4xf32, #tpu.memory_space<vmem>>, %arg7: memref<1x1xf32, #tpu.memory_space<vmem>>, %arg8: memref<256x4xf32, #tpu.memory_space<vmem>>) attributes {dimension_semantics = [#tpu.dimension_semantics<parallel>], iteration_bounds = array<i64: 3>, scalar_prefetch = 0 : i64, scratch_operands = 0 : i64, tpu.core_type = #tpu.core_type<tc>, window_params = [{transform_indices = @transform_0, window_bounds = array<i64: 256, 128>}, {transform_indices = @transform_1, window_bounds = array<i64: 256, 128>}, {transform_indices = @transform_2, window_bounds = array<i64: 256, 128>}, {pipeline_mode = #tpu.pipeline_mode<synchronous>, transform_indices = @transform_3, window_bounds = array<i64: 512, 128>}, {pipeline_mode = #tpu.pipeline_mode<synchronous>, transform_indices = @transform_4, window_bounds = array<i64: 1, 128>}, {pipeline_mode = #tpu.pipeline_mode<synchronous>, transform_indices = @transform_5, window_bounds = array<i64: 128, 4>}, {pipeline_mode = #tpu.pipeline_mode<synchronous>, transform_indices = @transform_6, window_bounds = array<i64: 1, 1>}, {transform_indices = @transform_7, window_bounds = array<i64: 256, 4>}]} {
    %c0 = arith.constant 0 : index
    %c0_0 = arith.constant 0 : index
    %0 = vector.load %arg1[%c0, %c0_0] : memref<256x128xbf16, #tpu.memory_space<vmem>>, vector<256x128xbf16>
    %1 = arith.extf %0 : vector<256x128xbf16> to vector<256x128xf32>
    %c0_1 = arith.constant 0 : index
    %c0_2 = arith.constant 0 : index
    %2 = vector.load %arg2[%c0_1, %c0_2] : memref<256x128xbf16, #tpu.memory_space<vmem>>, vector<256x128xbf16>
    %3 = arith.extf %2 : vector<256x128xbf16> to vector<256x128xf32>
    %c0_3 = arith.constant 0 : index
    %c0_4 = arith.constant 0 : index
    %4 = vector.load %arg3[%c0_3, %c0_4] : memref<256x128xbf16, #tpu.memory_space<vmem>>, vector<256x128xbf16>
    %5 = arith.extf %4 : vector<256x128xbf16> to vector<256x128xf32>
    %6 = arith.mulf %5, %1 : vector<256x128xf32>
    %7 = arith.subf %5, %1 : vector<256x128xf32>
    %8 = math.tanh %1 : vector<256x128xf32>
    %9 = arith.truncf %8 : vector<256x128xf32> to vector<256x128xbf16>
    %c0_5 = arith.constant 0 : index
    %c0_6 = arith.constant 0 : index
    %10 = vector.load %arg4[%c0_5, %c0_6] : memref<512x128xbf16, #tpu.memory_space<vmem>>, vector<128x128xbf16>
    %cst = arith.constant dense<0.000000e+00> : vector<256x128xf32>
    %11 = tpu.matmul %9, %10, %cst {dimension_numbers = #tpu.dot_dimension_numbers<[1], [0], [0], [1], [0, 0, 1, 1], [], []>} : vector<256x128xbf16>, vector<128x128xbf16>, vector<256x128xf32> -> vector<256x128xf32>
    %12 = math.tanh %3 : vector<256x128xf32>
    %13 = arith.truncf %12 : vector<256x128xf32> to vector<256x128xbf16>
    %c128 = arith.constant 128 : index
    %c0_7 = arith.constant 0 : index
    %14 = vector.load %arg4[%c128, %c0_7] : memref<512x128xbf16, #tpu.memory_space<vmem>>, vector<128x128xbf16>
    %cst_8 = arith.constant dense<0.000000e+00> : vector<256x128xf32>
    %15 = tpu.matmul %13, %14, %cst_8 {dimension_numbers = #tpu.dot_dimension_numbers<[1], [0], [0], [1], [0, 0, 1, 1], [], []>} : vector<256x128xbf16>, vector<128x128xbf16>, vector<256x128xf32> -> vector<256x128xf32>
    %16 = arith.addf %11, %15 : vector<256x128xf32>
    %17 = math.tanh %6 : vector<256x128xf32>
    %18 = arith.truncf %17 : vector<256x128xf32> to vector<256x128xbf16>
    %c256 = arith.constant 256 : index
    %c0_9 = arith.constant 0 : index
    %19 = vector.load %arg4[%c256, %c0_9] : memref<512x128xbf16, #tpu.memory_space<vmem>>, vector<128x128xbf16>
    %cst_10 = arith.constant dense<0.000000e+00> : vector<256x128xf32>
    %20 = tpu.matmul %18, %19, %cst_10 {dimension_numbers = #tpu.dot_dimension_numbers<[1], [0], [0], [1], [0, 0, 1, 1], [], []>} : vector<256x128xbf16>, vector<128x128xbf16>, vector<256x128xf32> -> vector<256x128xf32>
    %21 = arith.addf %16, %20 : vector<256x128xf32>
    %22 = math.tanh %7 : vector<256x128xf32>
    %23 = arith.truncf %22 : vector<256x128xf32> to vector<256x128xbf16>
    %c384 = arith.constant 384 : index
    %c0_11 = arith.constant 0 : index
    %24 = vector.load %arg4[%c384, %c0_11] : memref<512x128xbf16, #tpu.memory_space<vmem>>, vector<128x128xbf16>
    %cst_12 = arith.constant dense<0.000000e+00> : vector<256x128xf32>
    %25 = tpu.matmul %23, %24, %cst_12 {dimension_numbers = #tpu.dot_dimension_numbers<[1], [0], [0], [1], [0, 0, 1, 1], [], []>} : vector<256x128xbf16>, vector<128x128xbf16>, vector<256x128xf32> -> vector<256x128xf32>
    %26 = arith.addf %21, %25 : vector<256x128xf32>
    %c0_13 = arith.constant 0 : index
    %c0_14 = arith.constant 0 : index
    %27 = vector.load %arg5[%c0_13, %c0_14] : memref<1x128xf32, #tpu.memory_space<vmem>>, vector<1x128xf32>
    %28 = vector.broadcast %27 : vector<1x128xf32> to vector<256x128xf32>
    %29 = arith.addf %26, %28 : vector<256x128xf32>
    %30 = math.tanh %29 : vector<256x128xf32>
    %c0_15 = arith.constant 0 : index
    %c0_16 = arith.constant 0 : index
    %31 = vector.load %arg6[%c0_15, %c0_16] : memref<128x4xf32, #tpu.memory_space<vmem>>, vector<128x4xf32>
    %cst_17 = arith.constant dense<0.000000e+00> : vector<256x4xf32>
    %32 = tpu.matmul %30, %31, %cst_17 {dimension_numbers = #tpu.dot_dimension_numbers<[1], [0], [0], [1], [0, 0, 1, 1], [], []>} : vector<256x128xf32>, vector<128x4xf32>, vector<256x4xf32> -> vector<256x4xf32>
    %c0_18 = arith.constant 0 : index
    %c0_19 = arith.constant 0 : index
    %33 = vector.load %arg7[%c0_18, %c0_19] : memref<1x1xf32, #tpu.memory_space<vmem>>, vector<1x1xf32>
    %34 = vector.broadcast %33 : vector<1x1xf32> to vector<256x4xf32>
    %35 = arith.addf %32, %34 : vector<256x4xf32>
    %c0_20 = arith.constant 0 : index
    %c0_21 = arith.constant 0 : index
    %36 = vector.load %arg8[%c0_20, %c0_21] : memref<256x4xf32, #tpu.memory_space<vmem>>, vector<256x4xf32>
    tpu.vector_store %arg8[%c0_20, %c0_21], %35 {strides = array<i32>} : memref<256x4xf32, #tpu.memory_space<vmem>>, vector<256x4xf32>,
    return
  }
  func.func @transform_0(%arg0: i32) -> (i32, i32) {
    %c0_i32 = arith.constant 0 : i32
    %c0_i32_0 = arith.constant 0 : i32
    return %arg0, %c0_i32 : i32, i32
  }
  func.func @transform_1(%arg0: i32) -> (i32, i32) {
    %c0_i32 = arith.constant 0 : i32
    %c0_i32_0 = arith.constant 0 : i32
    return %arg0, %c0_i32 : i32, i32
  }
  func.func @transform_2(%arg0: i32) -> (i32, i32) {
    %c0_i32 = arith.constant 0 : i32
    %c0_i32_0 = arith.constant 0 : i32
    return %arg0, %c0_i32 : i32, i32
  }
  func.func @transform_3(%arg0: i32) -> (i32, i32) {
    %c0_i32 = arith.constant 0 : i32
    %c0_i32_0 = arith.constant 0 : i32
    %c0_i32_1 = arith.constant 0 : i32
    return %c0_i32, %c0_i32_0 : i32, i32
  }
  func.func @transform_4(%arg0: i32) -> (i32, i32) {
    %c0_i32 = arith.constant 0 : i32
    %c0_i32_0 = arith.constant 0 : i32
    %c0_i32_1 = arith.constant 0 : i32
    return %c0_i32, %c0_i32_0 : i32, i32
  }
  func.func @transform_5(%arg0: i32) -> (i32, i32) {
    %c0_i32 = arith.constant 0 : i32
    %c0_i32_0 = arith.constant 0 : i32
    %c0_i32_1 = arith.constant 0 : i32
    return %c0_i32, %c0_i32_0 : i32, i32
  }
  func.func @transform_6(%arg0: i32) -> (i32, i32) {
    %c0_i32 = arith.constant 0 : i32
    %c0_i32_0 = arith.constant 0 : i32
    %c0_i32_1 = arith.constant 0 : i32
    return %c0_i32, %c0_i32_0 : i32, i32
  }
  func.func @transform_7(%arg0: i32) -> (i32, i32) {
    %c0_i32 = arith.constant 0 : i32
    %c0_i32_0 = arith.constant 0 : i32
    return %arg0, %c0_i32 : i32, i32
  }
}

</mosaic_0001>

<llo_original>
// kernel: tpu_custom_call.1
$region0: #{tpu_custom_call.1}
  #allocation0 [shape = 'u32[]', space=smem, size = 0x4, offset = 0x4, fixed_abs, tag = 'smem constant byte address 0x4 - core index']
  #allocation1 [shape = 'u32[144,128]{1,0:T(1,128)}', space=vmem, size = 0x12000, scoped, tag = 'internal scratch']
  #allocation2 [shape = 'f32[1,1]{1,0:T(1,128)S(1)}', space=vmem, size = 0x200, scoped, tag = 'scoped memory for tpu_custom_call.1']
  %s0 = inlined_call_operand.hbm [shape: bf16[626,128], index: 0, kind: input, shape index: {}]
  %s1 = inlined_call_operand.hbm [shape: bf16[626,128], index: 1, kind: input, shape index: {}]
  %s2 = inlined_call_operand.hbm [shape: bf16[626,128], index: 2, kind: input, shape index: {}]
  %s3 = inlined_call_operand.hbm [shape: bf16[512,128], index: 3, kind: input, shape index: {}]
  %s4 = inlined_call_operand.vmem [shape: f32[1,128], index: 4, kind: input, shape index: {}]
  %s5 = inlined_call_operand.vmem [shape: f32[128,4], index: 5, kind: input, shape index: {}]
  %s6 = inlined_call_operand.<no memory space> [shape: f32[1,1], index: 6, kind: input, shape index: {}]
  %s7 = inlined_call_operand.vmem [shape: f32[626,4], index: 7, kind: output, shape index: {}]
  %s8 = sld [smem:[#allocation0]]
  $region125: #{tpu_custom_call.1} parent=0
    _
  %s10 = ssub.s32 1, %s8
  %s11 = scalar_select 0, %s10, %s8
  %v12 = vstv %s6
  %13 = vst [vmem:[#allocation2] sm:$0x1] %v12
  $region1: #{tpu_custom_call.1} parent=0
    #allocation3 [shape = 'u8[131072]{0}', space=vmem, size = 0x20000, scoped, tag = 'input window, operand 0']
    #allocation4 [shape = 's32[2]{0}', space=sflag, size = 0x8, scoped, tag = 'scoped memory for tpu_custom_call.1']
    #allocation5 [shape = 'u8[131072]{0}', space=vmem, size = 0x20000, scoped, tag = 'input window, operand 1']
    #allocation6 [shape = 's32[2]{0}', space=sflag, size = 0x8, scoped, tag = 'scoped memory for tpu_custom_call.1']
    #allocation7 [shape = 'u8[131072]{0}', space=vmem, size = 0x20000, scoped, tag = 'input window, operand 2']
    #allocation8 [shape = 'u8[131072]{0}', space=vmem, size = 0x20000, scoped, tag = 'input window, operand 3, single buffered']
    #allocation9 [shape = 's32[1]{0}', space=sflag, size = 0x4, scoped, tag = 'scoped memory for tpu_custom_call.1']
    #allocation10 [shape = 'u8[262144]{0}', space=vmem, size = 0x40000, scoped, tag = 'output window, operand 0']
    %14 = vsyncpa [#allocation4], 0
    %s15 = scalar_lea.sflag [#allocation4], 1
    %16 = vsyncpa %s15, 0
    %17 = vsyncpa [#allocation6], 0
    %s18 = scalar_lea.sflag [#allocation6], 1
    %19 = vsyncpa %s18, 0
    %20 = vsyncpa [#allocation9], 0
    loop: start=0, step=1, limit=5
    $region2: #{tpu_custom_call.1} parent=1 // loop_pre_header
      _
    $region3: #{tpu_custom_call.1} parent=1 // loop_header
      %s22 = sphi 0, %s26
      %p23 = scmp.ge.s32.totalorder %s22, 5
      %s32 = sphi 0, %s34
      %s35 = sphi 0, %s32
      %s36 = sphi 0, %s35
      %s52 = sphi 0, %s36
      %s58 = sphi 0, %s60
      %s61 = sphi 0, %s58
      %s62 = sphi 0, %s61
      %s78 = sphi 0, %s62
      %s84 = sphi 0, %s86
      %s87 = sphi 0, %s84
      %s88 = sphi 0, %s87
      %s104 = sphi 0, %s88
      %s108 = sphi 0, %s108
      %s110 = sphi 0, %s108
      %s111 = sphi 0, %s110
      %s125 = sphi 0, %s111
      %s129 = sphi 0, %s129
      %s131 = sphi 0, %s129
      %s132 = sphi 0, %s131
      %s146 = sphi 0, %s132
      %s150 = sphi 0, %s150
      %s152 = sphi 0, %s150
      %s153 = sphi 0, %s152
      %s167 = sphi 0, %s153
      %s171 = sphi 0, %s171
      %s173 = sphi 0, %s171
      %s174 = sphi 0, %s173
      %s188 = sphi 0, %s174
      %s194 = sphi 0, %s196
      %s197 = sphi 0, %s194
      %s198 = sphi 0, %s197
      %s214 = sphi 0, %s198
    $region4: #{tpu_custom_call.1} parent=1 // loop_header_branch
      %25 = sbr.rel (%p23) target = $region8
    $region5: #{tpu_custom_call.1} parent=1 // loop_body
      %s27 = ssub.s32 %s22, 1
      %s28 = ssub.s32 %s22, 2
      %s29 = sadd.s32 %s22, 1
      %s30 = ssub.s32 %s22, %s29
      %p31 = scmp.eq.s32.totalorder %s30, 0
      %s33 = sadd.s32 %s32, 1
      %s34 = scalar_select %p31, %s32, %s33
      %p37 = pneg %p31
      %p38 = scmp.eq.s32.totalorder %s22, 2
      %p39 = por %p37, %p38
      %p40 = scmp.ne.s32.totalorder %s32, %s35
      %p41 = scmp.eq.s32.totalorder %s22, 0
      %p42 = por %p40, %p41
      %p43 = scmp.ne.s32.totalorder %s32, %s35
      %p44 = scmp.eq.s32.totalorder %s27, 2
      %p45 = por %p43, %p44
      %p46 = scmp.ne.s32.totalorder %s35, %s36
      %p47 = scmp.eq.s32.totalorder %s27, 0
      %p48 = por %p46, %p47
      %p49 = scmp.ne.s32.totalorder %s35, %s36
      %p50 = scmp.eq.s32.totalorder %s28, 2
      %p51 = por %p49, %p50
      %p53 = scmp.ne.s32.totalorder %s36, %s52
      %p54 = scmp.eq.s32.totalorder %s28, 0
      %p55 = por %p53, %p54
      %s56 = ssub.s32 %s22, %s29
      %p57 = scmp.eq.s32.totalorder %s56, 0
      %s59 = sadd.s32 %s58, 1
      %s60 = scalar_select %p57, %s58, %s59
      %p63 = pneg %p57
      %p64 = scmp.eq.s32.totalorder %s22, 2
      %p65 = por %p63, %p64
      %p66 = scmp.ne.s32.totalorder %s58, %s61
      %p67 = scmp.eq.s32.totalorder %s22, 0
      %p68 = por %p66, %p67
      %p69 = scmp.ne.s32.totalorder %s58, %s61
      %p70 = scmp.eq.s32.totalorder %s27, 2
      %p71 = por %p69, %p70
      %p72 = scmp.ne.s32.totalorder %s61, %s62
      %p73 = scmp.eq.s32.totalorder %s27, 0
      %p74 = por %p72, %p73
      %p75 = scmp.ne.s32.totalorder %s61, %s62
      %p76 = scmp.eq.s32.totalorder %s28, 2
      %p77 = por %p75, %p76
      %p79 = scmp.ne.s32.totalorder %s62, %s78
      %p80 = scmp.eq.s32.totalorder %s28, 0
      %p81 = por %p79, %p80
      %s82 = ssub.s32 %s22, %s29
      %p83 = scmp.eq.s32.totalorder %s82, 0
      %s85 = sadd.s32 %s84, 1
      %s86 = scalar_select %p83, %s84, %s85
      %p89 = pneg %p83
      %p90 = scmp.eq.s32.totalorder %s22, 2
      %p91 = por %p89, %p90
      %p92 = scmp.ne.s32.totalorder %s84, %s87
      %p93 = scmp.eq.s32.totalorder %s22, 0
      %p94 = por %p92, %p93
      %p95 = scmp.ne.s32.totalorder %s84, %s87
      %p96 = scmp.eq.s32.totalorder %s27, 2
      %p97 = por %p95, %p96
      %p98 = scmp.ne.s32.totalorder %s87, %s88
      %p99 = scmp.eq.s32.totalorder %s27, 0
      %p100 = por %p98, %p99
      %p101 = scmp.ne.s32.totalorder %s87, %s88
      %p102 = scmp.eq.s32.totalorder %s28, 2
      %p103 = por %p101, %p102
      %p105 = scmp.ne.s32.totalorder %s88, %s104
      %p106 = scmp.eq.s32.totalorder %s28, 0
      %p107 = por %p105, %p106
      %s109 = sadd.s32 %s108, 1
      %p112 = scmp.eq.s32.totalorder %s22, 2
      %p113 = scmp.ne.s32.totalorder %s108, %s110
      %p114 = scmp.eq.s32.totalorder %s22, 0
      %p115 = por %p113, %p114
      %p116 = scmp.ne.s32.totalorder %s108, %s110
      %p117 = scmp.eq.s32.totalorder %s27, 2
      %p118 = por %p116, %p117
      %p119 = scmp.ne.s32.totalorder %s110, %s111
      %p120 = scmp.eq.s32.totalorder %s27, 0
      %p121 = por %p119, %p120
      %p122 = scmp.ne.s32.totalorder %s110, %s111
      %p123 = scmp.eq.s32.totalorder %s28, 2
      %p124 = por %p122, %p123
      %p126 = scmp.ne.s32.totalorder %s111, %s125
      %p127 = scmp.eq.s32.totalorder %s28, 0
      %p128 = por %p126, %p127
      %s130 = sadd.s32 %s129, 1
      %p133 = scmp.eq.s32.totalorder %s22, 2
      %p134 = scmp.ne.s32.totalorder %s129, %s131
      %p135 = scmp.eq.s32.totalorder %s22, 0
      %p136 = por %p134, %p135
      %p137 = scmp.ne.s32.totalorder %s129, %s131
      %p138 = scmp.eq.s32.totalorder %s27, 2
      %p139 = por %p137, %p138
      %p140 = scmp.ne.s32.totalorder %s131, %s132
      %p141 = scmp.eq.s32.totalorder %s27, 0
      %p142 = por %p140, %p141
      %p143 = scmp.ne.s32.totalorder %s131, %s132
      %p144 = scmp.eq.s32.totalorder %s28, 2
      %p145 = por %p143, %p144
      %p147 = scmp.ne.s32.totalorder %s132, %s146
      %p148 = scmp.eq.s32.totalorder %s28, 0
      %p149 = por %p147, %p148
      %s151 = sadd.s32 %s150, 1
      %p154 = scmp.eq.s32.totalorder %s22, 2
      %p155 = scmp.ne.s32.totalorder %s150, %s152
      %p156 = scmp.eq.s32.totalorder %s22, 0
      %p157 = por %p155, %p156
      %p158 = scmp.ne.s32.totalorder %s150, %s152
      %p159 = scmp.eq.s32.totalorder %s27, 2
      %p160 = por %p158, %p159
      %p161 = scmp.ne.s32.totalorder %s152, %s153
      %p162 = scmp.eq.s32.totalorder %s27, 0
      %p163 = por %p161, %p162
      %p164 = scmp.ne.s32.totalorder %s152, %s153
      %p165 = scmp.eq.s32.totalorder %s28, 2
      %p166 = por %p164, %p165
      %p168 = scmp.ne.s32.totalorder %s153, %s167
      %p169 = scmp.eq.s32.totalorder %s28, 0
      %p170 = por %p168, %p169
      %s172 = sadd.s32 %s171, 1
      %p175 = scmp.eq.s32.totalorder %s22, 2
      %p176 = scmp.ne.s32.totalorder %s171, %s173
      %p177 = scmp.eq.s32.totalorder %s22, 0
      %p178 = por %p176, %p177
      %p179 = scmp.ne.s32.totalorder %s171, %s173
      %p180 = scmp.eq.s32.totalorder %s27, 2
      %p181 = por %p179, %p180
      %p182 = scmp.ne.s32.totalorder %s173, %s174
      %p183 = scmp.eq.s32.totalorder %s27, 0
      %p184 = por %p182, %p183
      %p185 = scmp.ne.s32.totalorder %s173, %s174
      %p186 = scmp.eq.s32.totalorder %s28, 2
      %p187 = por %p185, %p186
      %p189 = scmp.ne.s32.totalorder %s174, %s188
      %p190 = scmp.eq.s32.totalorder %s28, 0
      %p191 = por %p189, %p190
      %s192 = ssub.s32 %s22, %s29
      %p193 = scmp.eq.s32.totalorder %s192, 0
      %s195 = sadd.s32 %s194, 1
      %s196 = scalar_select %p193, %s194, %s195
      %p199 = pneg %p193
      %p200 = scmp.eq.s32.totalorder %s22, 2
      %p201 = por %p199, %p200
      %p202 = scmp.ne.s32.totalorder %s194, %s197
      %p203 = scmp.eq.s32.totalorder %s22, 0
      %p204 = por %p202, %p203
      %p205 = scmp.ne.s32.totalorder %s194, %s197
      %p206 = scmp.eq.s32.totalorder %s27, 2
      %p207 = por %p205, %p206
      %p208 = scmp.ne.s32.totalorder %s197, %s198
      %p209 = scmp.eq.s32.totalorder %s27, 0
      %p210 = por %p208, %p209
      %p211 = scmp.ne.s32.totalorder %s197, %s198
      %p212 = scmp.eq.s32.totalorder %s28, 2
      %p213 = por %p211, %p212
      %p215 = scmp.ne.s32.totalorder %s198, %s214
      %p216 = scmp.eq.s32.totalorder %s28, 0
      %p217 = por %p215, %p216
      %p218 = scmp.le.s32.totalorder 1, %s22
      %p219 = scmp.lt.s32.totalorder %s22, 4
      %p220 = pnand %p218, %p219
      %p221 = pneg %p220
      // Predicated region
      $region9: #{tpu_custom_call.1} parent=5 // pred_check
        _
      $region10: #{tpu_custom_call.1} parent=5 // pred_check_branch
        %223 = sbr.rel (%p220) target = $region12
      $region11: #{tpu_custom_call.1} parent=5 // pred_region
        %s224 = ssub.s32 %s22, 1
        // Predicated region
        $region13: #{tpu_custom_call.1} parent=11 // pred_check
          %p225 = pneg %p121
        $region14: #{tpu_custom_call.1} parent=11 // pred_check_branch
          %227 = sbr.rel (%p225) target = $region16
        $region15: #{tpu_custom_call.1} parent=11 // pred_region
          %s229 = ssub.s32 4096, 4096
          %230 = vsyncadd [#allocation9], %s229
          %s231 = sshll.u32 [#allocation8], 4
          %s232 = int_to_ptr.vmem [resolvable:$true] %s231
          %237 = dma.hbm_to_vmem [thread:$0]  %s3, 4096, %s232, [#allocation9], 64, 64, 4
        $region16: #{tpu_custom_call.1} parent=11 // pred_fallthru
          _
        // Predicated region
        $region17: #{tpu_custom_call.1} parent=11 // pred_check
          %p238 = pneg %p142
        $region18: #{tpu_custom_call.1} parent=11 // pred_check_branch
          %240 = sbr.rel (%p238) target = $region20
        $region19: #{tpu_custom_call.1} parent=11 // pred_region
          _
        $region20: #{tpu_custom_call.1} parent=11 // pred_fallthru
          _
        // Predicated region
        $region21: #{tpu_custom_call.1} parent=11 // pred_check
          %p241 = pneg %p163
        $region22: #{tpu_custom_call.1} parent=11 // pred_check_branch
          %243 = sbr.rel (%p241) target = $region24
        $region23: #{tpu_custom_call.1} parent=11 // pred_region
          _
        $region24: #{tpu_custom_call.1} parent=11 // pred_fallthru
          _
        // Predicated region
        $region25: #{tpu_custom_call.1} parent=11 // pred_check
          %p244 = pneg %p184
        $region26: #{tpu_custom_call.1} parent=11 // pred_check_branch
          %246 = sbr.rel (%p244) target = $region28
        $region27: #{tpu_custom_call.1} parent=11 // pred_region
          _
        $region28: #{tpu_custom_call.1} parent=11 // pred_fallthru
          _
      $region12: #{tpu_custom_call.1} parent=5 // pred_fallthru
        _
      %p247 = scmp.lt.s32.totalorder %s22, 3
      // Predicated region
      $region29: #{tpu_custom_call.1} parent=5 // pred_check
        %p248 = pneg %p247
      $region30: #{tpu_custom_call.1} parent=5 // pred_check_branch
        %250 = sbr.rel (%p248) target = $region32
      $region31: #{tpu_custom_call.1} parent=5 // pred_region
        // Predicated region
        $region33: #{tpu_custom_call.1} parent=31 // pred_check
          %p251 = pneg %p42
        $region34: #{tpu_custom_call.1} parent=31 // pred_check_branch
          %253 = sbr.rel (%p251) target = $region36
        $region35: #{tpu_custom_call.1} parent=31 // pred_region
          %s254 = sand.u32 %s32, 1
          %s255 = scalar_lea.sflag [#allocation4], %s254
          %s256 = sand.u32 %s32, 1
          %s257 = smul.addr %s256, 128
          %s258 = scalar_lea.vmem [#allocation3], %s257
          %s259 = smul.u32 32, %s22
          %s260 = ssub.s32 79, %s259
          %p261 = scmp.lt.s32.totalorder %s260, 32
          %s262 = scalar_select %p261, %s260, 32
          %s263 = smul.u32 64, %s262
          %s265 = ssub.s32 2048, %s263
          %266 = vsyncadd %s255, %s265
          %p267 = scmp.ne.s32.totalorder 0, %s263
          %s268 = smul.addr %s259, 64
          %s269 = scalar_lea.hbm %s0, %s268
          %s270 = smul.u32 4, %s262
          %s271 = sshll.u32 %s258, 4
          %s272 = int_to_ptr.vmem [resolvable:$true] %s271
          %s273 = sshll.u32 %s270, 4
          %277 = dma.hbm_to_vmem [thread:$0]  (%p267), %s269, %s273, %s272, %s255, 64, 64, 4
        $region36: #{tpu_custom_call.1} parent=31 // pred_fallthru
          _
        // Predicated region
        $region37: #{tpu_custom_call.1} parent=31 // pred_check
          %p278 = pneg %p68
        $region38: #{tpu_custom_call.1} parent=31 // pred_check_branch
          %280 = sbr.rel (%p278) target = $region40
        $region39: #{tpu_custom_call.1} parent=31 // pred_region
          %s281 = sand.u32 %s22, 1
          %s282 = scalar_lea.sflag [#allocation6], %s281
          %s283 = sand.u32 %s58, 1
          %s284 = smul.addr %s283, 128
          %s285 = scalar_lea.vmem [#allocation5], %s284
          %s286 = smul.u32 32, %s22
          %s287 = ssub.s32 79, %s286
          %p288 = scmp.lt.s32.totalorder %s287, 32
          %s289 = scalar_select %p288, %s287, 32
          %s290 = smul.u32 64, %s289
          %s292 = ssub.s32 2048, %s290
          %293 = vsyncadd %s282, %s292
          %p294 = scmp.ne.s32.totalorder 0, %s290
          %s295 = smul.addr %s286, 64
          %s296 = scalar_lea.hbm %s1, %s295
          %s297 = smul.u32 4, %s289
          %s298 = sshll.u32 %s285, 4
          %s299 = int_to_ptr.vmem [resolvable:$true] %s298
          %s300 = sshll.u32 %s297, 4
          %304 = dma.hbm_to_vmem [thread:$0]  (%p294), %s296, %s300, %s299, %s282, 64, 64, 4
        $region40: #{tpu_custom_call.1} parent=31 // pred_fallthru
          _
        // Predicated region
        $region41: #{tpu_custom_call.1} parent=31 // pred_check
          %p305 = pneg %p94
        $region42: #{tpu_custom_call.1} parent=31 // pred_check_branch
          %307 = sbr.rel (%p305) target = $region44
        $region43: #{tpu_custom_call.1} parent=31 // pred_region
          %s308 = sand.u32 %s22, 1
          %s309 = scalar_lea.sflag [#allocation6], %s308
          %s310 = sand.u32 %s84, 1
          %s311 = smul.addr %s310, 128
          %s312 = scalar_lea.vmem [#allocation7], %s311
          %s313 = smul.u32 32, %s22
          %s314 = ssub.s32 79, %s313
          %p315 = scmp.lt.s32.totalorder %s314, 32
          %s316 = scalar_select %p315, %s314, 32
          %s317 = smul.u32 64, %s316
          %s319 = ssub.s32 2048, %s317
          %320 = vsyncadd %s309, %s319
          %p321 = scmp.ne.s32.totalorder 0, %s317
          %s322 = smul.addr %s313, 64
          %s323 = scalar_lea.hbm %s2, %s322
          %s324 = smul.u32 4, %s316
          %s325 = sshll.u32 %s312, 4
          %s326 = int_to_ptr.vmem [resolvable:$true] %s325
          %s327 = sshll.u32 %s324, 4
          %331 = dma.hbm_to_vmem [thread:$0]  (%p321), %s323, %s327, %s326, %s309, 64, 64, 4
        $region44: #{tpu_custom_call.1} parent=31 // pred_fallthru
          _
      $region32: #{tpu_custom_call.1} parent=5 // pred_fallthru
        _
      %p332 = scmp.le.s32.totalorder 1, %s22
      %p333 = scmp.lt.s32.totalorder %s22, 4
      %p334 = pnand %p332, %p333
      %p335 = pneg %p334
      // Predicated region
      $region45: #{tpu_custom_call.1} parent=5 // pred_check
        _
      $region46: #{tpu_custom_call.1} parent=5 // pred_check_branch
        %337 = sbr.rel (%p334) target = $region48
      $region47: #{tpu_custom_call.1} parent=5 // pred_region
        %s338 = ssub.s32 %s22, 1
        %s339 = sand.u32 %s35, 1
        %s340 = scalar_lea.sflag [#allocation4], %s339
        %s341 = sand.u32 %s35, 1
        %s342 = smul.addr %s341, 128
        %s343 = scalar_lea.vmem [#allocation3], %s342
        // Predicated region
        $region49: #{tpu_custom_call.1} parent=47 // pred_check
          %p344 = pneg %p48
        $region50: #{tpu_custom_call.1} parent=47 // pred_check_branch
          %346 = sbr.rel (%p344) target = $region52
        $region51: #{tpu_custom_call.1} parent=47 // pred_region
          %347 = dma.done %s340, 2048
        $region52: #{tpu_custom_call.1} parent=47 // pred_fallthru
          _
        %s348 = sand.u32 %s27, 1
        %s349 = scalar_lea.sflag [#allocation6], %s348
        %s350 = sand.u32 %s61, 1
        %s351 = smul.addr %s350, 128
        %s352 = scalar_lea.vmem [#allocation5], %s351
        // Predicated region
        $region53: #{tpu_custom_call.1} parent=47 // pred_check
          %p353 = pneg %p74
        $region54: #{tpu_custom_call.1} parent=47 // pred_check_branch
          %355 = sbr.rel (%p353) target = $region56
        $region55: #{tpu_custom_call.1} parent=47 // pred_region
          %356 = dma.done %s349, 2048
        $region56: #{tpu_custom_call.1} parent=47 // pred_fallthru
          _
        %s357 = sand.u32 %s27, 1
        %s358 = scalar_lea.sflag [#allocation6], %s357
        %s359 = sand.u32 %s87, 1
        %s360 = smul.addr %s359, 128
        %s361 = scalar_lea.vmem [#allocation7], %s360
        // Predicated region
        $region57: #{tpu_custom_call.1} parent=47 // pred_check
          %p362 = pneg %p100
        $region58: #{tpu_custom_call.1} parent=47 // pred_check_branch
          %364 = sbr.rel (%p362) target = $region60
        $region59: #{tpu_custom_call.1} parent=47 // pred_region
          %365 = dma.done %s358, 2048
        $region60: #{tpu_custom_call.1} parent=47 // pred_fallthru
          _
        // Predicated region
        $region61: #{tpu_custom_call.1} parent=47 // pred_check
          %p366 = pneg %p121
        $region62: #{tpu_custom_call.1} parent=47 // pred_check_branch
          %368 = sbr.rel (%p366) target = $region64
        $region63: #{tpu_custom_call.1} parent=47 // pred_region
          %369 = dma.done [#allocation9], 4096
        $region64: #{tpu_custom_call.1} parent=47 // pred_fallthru
          _
        %s370 = sand.u32 %s35, 1
        %s371 = scalar_lea.sflag [#allocation4], %s370
        %s372 = sand.u32 %s35, 1
        %s373 = smul.addr %s372, 128
        %s374 = scalar_lea.vmem [#allocation3], %s373
        %p375 = pneg %p48
        %p376 = pneg %p45
        %s377 = sand.u32 %s27, 1
        %s378 = scalar_lea.sflag [#allocation6], %s377
        %s379 = sand.u32 %s61, 1
        %s380 = smul.addr %s379, 128
        %s381 = scalar_lea.vmem [#allocation5], %s380
        %p382 = pneg %p74
        %p383 = pneg %p71
        %s384 = sand.u32 %s27, 1
        %s385 = scalar_lea.sflag [#allocation6], %s384
        %s386 = sand.u32 %s87, 1
        %s387 = smul.addr %s386, 128
        %s388 = scalar_lea.vmem [#allocation7], %s387
        %p389 = pneg %p100
        %p390 = pneg %p97
        %p391 = pneg %p121
        %p392 = pneg %p118
        %p393 = pneg %p142
        %p394 = pneg %p139
        %p395 = pneg %p163
        %p396 = pneg %p160
        %p397 = pneg %p184
        %p398 = pneg %p181
        %p399 = pneg %p210
        %p400 = pneg %p207
        %s401 = sand.u32 %s197, 1
        %s402 = sand.u32 %s197, 1
        %s403 = smul.addr %s402, 256
        %s404 = scalar_lea.vmem [#allocation10], %s403
        %s405 = smul.u32 32, %s27
        %s406 = ssub.s32 79, %s405
        %p407 = scmp.lt.s32.totalorder %s406, 32
        %s408 = scalar_select %p407, %s406, 32
        %s409 = smul.u32 64, %s408
        %s410 = smul.u32 32, %s27
        %s411 = ssub.s32 79, %s410
        %p412 = scmp.lt.s32.totalorder %s411, 32
        %s413 = scalar_select %p412, %s411, 32
        %s414 = smul.u32 64, %s413
        %s415 = smul.u32 32, %s27
        %s416 = ssub.s32 79, %s415
        %p417 = scmp.lt.s32.totalorder %s416, 32
        %s418 = scalar_select %p417, %s416, 32
        %s419 = smul.u32 64, %s418
        %s420 = smul.u32 32, %s27
        %s421 = ssub.s32 79, %s420
        %p422 = scmp.lt.s32.totalorder %s421, 32
        %s423 = scalar_select %p422, %s421, 32
        %s424 = smul.u32 128, %s423
        %v426 = vld [vmem:[%s343] sm:$0xf]
        %v427 = vld [vmem:[%s343 + $0x4] sm:$0xf]
        %v428 = vld [vmem:[%s343 + $0x8] sm:$0xf]
        %v429 = vld [vmem:[%s343 + $0xc] sm:$0xf]
        %v430 = vld [vmem:[%s343 + $0x10] sm:$0xf]
        %v431 = vld [vmem:[%s343 + $0x14] sm:$0xf]
        %v432 = vld [vmem:[%s343 + $0x18] sm:$0xf]
        %v433 = vld [vmem:[%s343 + $0x1c] sm:$0xf]
        %v434 = vld [vmem:[%s343 + $0x20] sm:$0xf]
        %v435 = vld [vmem:[%s343 + $0x24] sm:$0xf]
        %v436 = vld [vmem:[%s343 + $0x28] sm:$0xf]
        %v437 = vld [vmem:[%s343 + $0x2c] sm:$0xf]
        %v438 = vld [vmem:[%s343 + $0x30] sm:$0xf]
        %v439 = vld [vmem:[%s343 + $0x34] sm:$0xf]
        %v440 = vld [vmem:[%s343 + $0x38] sm:$0xf]
        %v441 = vld [vmem:[%s343 + $0x3c] sm:$0xf]
        %v442 = vld [vmem:[%s343 + $0x40] sm:$0xf]
        %v443 = vld [vmem:[%s343 + $0x44] sm:$0xf]
        %v444 = vld [vmem:[%s343 + $0x48] sm:$0xf]
        %v445 = vld [vmem:[%s343 + $0x4c] sm:$0xf]
        %v446 = vld [vmem:[%s343 + $0x50] sm:$0xf]
        %v447 = vld [vmem:[%s343 + $0x54] sm:$0xf]
        %v448 = vld [vmem:[%s343 + $0x58] sm:$0xf]
        %v449 = vld [vmem:[%s343 + $0x5c] sm:$0xf]
        %v450 = vld [vmem:[%s343 + $0x60] sm:$0xf]
        %v451 = vld [vmem:[%s343 + $0x64] sm:$0xf]
        %v452 = vld [vmem:[%s343 + $0x68] sm:$0xf]
        %v453 = vld [vmem:[%s343 + $0x6c] sm:$0xf]
        %v454 = vld [vmem:[%s343 + $0x70] sm:$0xf]
        %v455 = vld [vmem:[%s343 + $0x74] sm:$0xf]
        %v456 = vld [vmem:[%s343 + $0x78] sm:$0xf]
        %v457 = vld [vmem:[%s343 + $0x7c] sm:$0xf]
        %v458 = vunpack.c.l.bf16 %v426
        %v459 = vunpack.c.l.bf16 %v427
        %v460 = vunpack.c.l.bf16 %v428
        %v461 = vunpack.c.l.bf16 %v429
        %v462 = vunpack.c.l.bf16 %v430
        %v463 = vunpack.c.l.bf16 %v431
        %v464 = vunpack.c.l.bf16 %v432
        %v465 = vunpack.c.l.bf16 %v433
        %v466 = vunpack.c.l.bf16 %v434
        %v467 = vunpack.c.l.bf16 %v435
        %v468 = vunpack.c.l.bf16 %v436
        %v469 = vunpack.c.l.bf16 %v437
        %v470 = vunpack.c.l.bf16 %v438
        %v471 = vunpack.c.l.bf16 %v439
        %v472 = vunpack.c.l.bf16 %v440
        %v473 = vunpack.c.l.bf16 %v441
        %v474 = vunpack.c.l.bf16 %v442
        %v475 = vunpack.c.l.bf16 %v443
        %v476 = vunpack.c.l.bf16 %v444
        %v477 = vunpack.c.l.bf16 %v445
        %v478 = vunpack.c.l.bf16 %v446
        %v479 = vunpack.c.l.bf16 %v447
        %v480 = vunpack.c.l.bf16 %v448
        %v481 = vunpack.c.l.bf16 %v449
        %v482 = vunpack.c.l.bf16 %v450
        %v483 = vunpack.c.l.bf16 %v451
        %v484 = vunpack.c.l.bf16 %v452
        %v485 = vunpack.c.l.bf16 %v453
        %v486 = vunpack.c.l.bf16 %v454
        %v487 = vunpack.c.l.bf16 %v455
        %v488 = vunpack.c.l.bf16 %v456
        %v489 = vunpack.c.l.bf16 %v457
        %v490 = vld [vmem:[%s352] sm:$0xf]
        %v491 = vld [vmem:[%s352 + $0x4] sm:$0xf]
        %v492 = vld [vmem:[%s352 + $0x8] sm:$0xf]
        %v493 = vld [vmem:[%s352 + $0xc] sm:$0xf]
        %v494 = vld [vmem:[%s352 + $0x10] sm:$0xf]
        %v495 = vld [vmem:[%s352 + $0x14] sm:$0xf]
        %v496 = vld [vmem:[%s352 + $0x18] sm:$0xf]
        %v497 = vld [vmem:[%s352 + $0x1c] sm:$0xf]
        %v498 = vld [vmem:[%s352 + $0x20] sm:$0xf]
        %v499 = vld [vmem:[%s352 + $0x24] sm:$0xf]
        %v500 = vld [vmem:[%s352 + $0x28] sm:$0xf]
        %v501 = vld [vmem:[%s352 + $0x2c] sm:$0xf]
        %v502 = vld [vmem:[%s352 + $0x30] sm:$0xf]
        %v503 = vld [vmem:[%s352 + $0x34] sm:$0xf]
        %v504 = vld [vmem:[%s352 + $0x38] sm:$0xf]
        %v505 = vld [vmem:[%s352 + $0x3c] sm:$0xf]
        %v506 = vld [vmem:[%s352 + $0x40] sm:$0xf]
        %v507 = vld [vmem:[%s352 + $0x44] sm:$0xf]
        %v508 = vld [vmem:[%s352 + $0x48] sm:$0xf]
        %v509 = vld [vmem:[%s352 + $0x4c] sm:$0xf]
        %v510 = vld [vmem:[%s352 + $0x50] sm:$0xf]
        %v511 = vld [vmem:[%s352 + $0x54] sm:$0xf]
        %v512 = vld [vmem:[%s352 + $0x58] sm:$0xf]
        %v513 = vld [vmem:[%s352 + $0x5c] sm:$0xf]
        %v514 = vld [vmem:[%s352 + $0x60] sm:$0xf]
        %v515 = vld [vmem:[%s352 + $0x64] sm:$0xf]
        %v516 = vld [vmem:[%s352 + $0x68] sm:$0xf]
        %v517 = vld [vmem:[%s352 + $0x6c] sm:$0xf]
        %v518 = vld [vmem:[%s352 + $0x70] sm:$0xf]
        %v519 = vld [vmem:[%s352 + $0x74] sm:$0xf]
        %v520 = vld [vmem:[%s352 + $0x78] sm:$0xf]
        %v521 = vld [vmem:[%s352 + $0x7c] sm:$0xf]
        %v522 = vunpack.c.l.bf16 %v490
        %v523 = vunpack.c.l.bf16 %v491
        %v524 = vunpack.c.l.bf16 %v492
        %v525 = vunpack.c.l.bf16 %v493
        %v526 = vunpack.c.l.bf16 %v494
        %v527 = vunpack.c.l.bf16 %v495
        %v528 = vunpack.c.l.bf16 %v496
        %v529 = vunpack.c.l.bf16 %v497
        %v530 = vunpack.c.l.bf16 %v498
        %v531 = vunpack.c.l.bf16 %v499
        %v532 = vunpack.c.l.bf16 %v500
        %v533 = vunpack.c.l.bf16 %v501
        %v534 = vunpack.c.l.bf16 %v502
        %v535 = vunpack.c.l.bf16 %v503
        %v536 = vunpack.c.l.bf16 %v504
        %v537 = vunpack.c.l.bf16 %v505
        %v538 = vunpack.c.l.bf16 %v506
        %v539 = vunpack.c.l.bf16 %v507
        %v540 = vunpack.c.l.bf16 %v508
        %v541 = vunpack.c.l.bf16 %v509
        %v542 = vunpack.c.l.bf16 %v510
        %v543 = vunpack.c.l.bf16 %v511
        %v544 = vunpack.c.l.bf16 %v512
        %v545 = vunpack.c.l.bf16 %v513
        %v546 = vunpack.c.l.bf16 %v514
        %v547 = vunpack.c.l.bf16 %v515
        %v548 = vunpack.c.l.bf16 %v516
        %v549 = vunpack.c.l.bf16 %v517
        %v550 = vunpack.c.l.bf16 %v518
        %v551 = vunpack.c.l.bf16 %v519
        %v552 = vunpack.c.l.bf16 %v520
        %v553 = vunpack.c.l.bf16 %v521
        %v554 = vld [vmem:[%s361] sm:$0xf]
        %v555 = vld [vmem:[%s361 + $0x4] sm:$0xf]
        %v556 = vld [vmem:[%s361 + $0x8] sm:$0xf]
        %v557 = vld [vmem:[%s361 + $0xc] sm:$0xf]
        %v558 = vld [vmem:[%s361 + $0x10] sm:$0xf]
        %v559 = vld [vmem:[%s361 + $0x14] sm:$0xf]
        %v560 = vld [vmem:[%s361 + $0x18] sm:$0xf]
        %v561 = vld [vmem:[%s361 + $0x1c] sm:$0xf]
        %v562 = vld [vmem:[%s361 + $0x20] sm:$0xf]
        %v563 = vld [vmem:[%s361 + $0x24] sm:$0xf]
        %v564 = vld [vmem:[%s361 + $0x28] sm:$0xf]
        %v565 = vld [vmem:[%s361 + $0x2c] sm:$0xf]
        %v566 = vld [vmem:[%s361 + $0x30] sm:$0xf]
        %v567 = vld [vmem:[%s361 + $0x34] sm:$0xf]
        %v568 = vld [vmem:[%s361 + $0x38] sm:$0xf]
        %v569 = vld [vmem:[%s361 + $0x3c] sm:$0xf]
        %v570 = vld [vmem:[%s361 + $0x40] sm:$0xf]
        %v571 = vld [vmem:[%s361 + $0x44] sm:$0xf]
        %v572 = vld [vmem:[%s361 + $0x48] sm:$0xf]
        %v573 = vld [vmem:[%s361 + $0x4c] sm:$0xf]
        %v574 = vld [vmem:[%s361 + $0x50] sm:$0xf]
        %v575 = vld [vmem:[%s361 + $0x54] sm:$0xf]
        %v576 = vld [vmem:[%s361 + $0x58] sm:$0xf]
        %v577 = vld [vmem:[%s361 + $0x5c] sm:$0xf]
        %v578 = vld [vmem:[%s361 + $0x60] sm:$0xf]
        %v579 = vld [vmem:[%s361 + $0x64] sm:$0xf]
        %v580 = vld [vmem:[%s361 + $0x68] sm:$0xf]
        %v581 = vld [vmem:[%s361 + $0x6c] sm:$0xf]
        %v582 = vld [vmem:[%s361 + $0x70] sm:$0xf]
        %v583 = vld [vmem:[%s361 + $0x74] sm:$0xf]
        %v584 = vld [vmem:[%s361 + $0x78] sm:$0xf]
        %v585 = vld [vmem:[%s361 + $0x7c] sm:$0xf]
        %v586 = vunpack.c.l.bf16 %v554
        %v587 = vunpack.c.l.bf16 %v555
        %v588 = vunpack.c.l.bf16 %v556
        %v589 = vunpack.c.l.bf16 %v557
        %v590 = vunpack.c.l.bf16 %v558
        %v591 = vunpack.c.l.bf16 %v559
        %v592 = vunpack.c.l.bf16 %v560
        %v593 = vunpack.c.l.bf16 %v561
        %v594 = vunpack.c.l.bf16 %v562
        %v595 = vunpack.c.l.bf16 %v563
        %v596 = vunpack.c.l.bf16 %v564
        %v597 = vunpack.c.l.bf16 %v565
        %v598 = vunpack.c.l.bf16 %v566
        %v599 = vunpack.c.l.bf16 %v567
        %v600 = vunpack.c.l.bf16 %v568
        %v601 = vunpack.c.l.bf16 %v569
        %v602 = vunpack.c.l.bf16 %v570
        %v603 = vunpack.c.l.bf16 %v571
        %v604 = vunpack.c.l.bf16 %v572
        %v605 = vunpack.c.l.bf16 %v573
        %v606 = vunpack.c.l.bf16 %v574
        %v607 = vunpack.c.l.bf16 %v575
        %v608 = vunpack.c.l.bf16 %v576
        %v609 = vunpack.c.l.bf16 %v577
        %v610 = vunpack.c.l.bf16 %v578
        %v611 = vunpack.c.l.bf16 %v579
        %v612 = vunpack.c.l.bf16 %v580
        %v613 = vunpack.c.l.bf16 %v581
        %v614 = vunpack.c.l.bf16 %v582
        %v615 = vunpack.c.l.bf16 %v583
        %v616 = vunpack.c.l.bf16 %v584
        %v617 = vunpack.c.l.bf16 %v585
        %v618 = vmul.f32 %v586, %v458
        %v619 = vmul.f32 %v587, %v459
        %v620 = vmul.f32 %v588, %v460
        %v621 = vmul.f32 %v589, %v461
        %v622 = vmul.f32 %v590, %v462
        %v623 = vmul.f32 %v591, %v463
        %v624 = vmul.f32 %v592, %v464
        %v625 = vmul.f32 %v593, %v465
        %v626 = vmul.f32 %v594, %v466
        %v627 = vmul.f32 %v595, %v467
        %v628 = vmul.f32 %v596, %v468
        %v629 = vmul.f32 %v597, %v469
        %v630 = vmul.f32 %v598, %v470
        %v631 = vmul.f32 %v599, %v471
        %v632 = vmul.f32 %v600, %v472
        %v633 = vmul.f32 %v601, %v473
        %v634 = vmul.f32 %v602, %v474
        %v635 = vmul.f32 %v603, %v475
        %v636 = vmul.f32 %v604, %v476
        %v637 = vmul.f32 %v605, %v477
        %v638 = vmul.f32 %v606, %v478
        %v639 = vmul.f32 %v607, %v479
        %v640 = vmul.f32 %v608, %v480
        %v641 = vmul.f32 %v609, %v481
        %v642 = vmul.f32 %v610, %v482
        %v643 = vmul.f32 %v611, %v483
        %v644 = vmul.f32 %v612, %v484
        %v645 = vmul.f32 %v613, %v485
        %v646 = vmul.f32 %v614, %v486
        %v647 = vmul.f32 %v615, %v487
        %v648 = vmul.f32 %v616, %v488
        %v649 = vmul.f32 %v617, %v489
        %v650 = vsub.f32 %v586, %v458
        %v651 = vsub.f32 %v587, %v459
        %v652 = vsub.f32 %v588, %v460
        %v653 = vsub.f32 %v589, %v461
        %v654 = vsub.f32 %v590, %v462
        %v655 = vsub.f32 %v591, %v463
        %v656 = vsub.f32 %v592, %v464
        %v657 = vsub.f32 %v593, %v465
        %v658 = vsub.f32 %v594, %v466
        %v659 = vsub.f32 %v595, %v467
        %v660 = vsub.f32 %v596, %v468
        %v661 = vsub.f32 %v597, %v469
        %v662 = vsub.f32 %v598, %v470
        %v663 = vsub.f32 %v599, %v471
        %v664 = vsub.f32 %v600, %v472
        %v665 = vsub.f32 %v601, %v473
        %v666 = vsub.f32 %v602, %v474
        %v667 = vsub.f32 %v603, %v475
        %v668 = vsub.f32 %v604, %v476
        %v669 = vsub.f32 %v605, %v477
        %v670 = vsub.f32 %v606, %v478
        %v671 = vsub.f32 %v607, %v479
        %v672 = vsub.f32 %v608, %v480
        %v673 = vsub.f32 %v609, %v481
        %v674 = vsub.f32 %v610, %v482
        %v675 = vsub.f32 %v611, %v483
        %v676 = vsub.f32 %v612, %v484
        %v677 = vsub.f32 %v613, %v485
        %v678 = vsub.f32 %v614, %v486
        %v679 = vsub.f32 %v615, %v487
        %v680 = vsub.f32 %v616, %v488
        %v681 = vsub.f32 %v617, %v489
        %v682 = vtanh.pop %v458
        %v683 = vtanh.pop %v459
        %v684 = vtanh.pop %v460
        %v685 = vtanh.pop %v461
        %v686 = vtanh.pop %v462
        %v687 = vtanh.pop %v463
        %v688 = vtanh.pop %v464
        %v689 = vtanh.pop %v465
        %v690 = vtanh.pop %v466
        %v691 = vtanh.pop %v467
        %v692 = vtanh.pop %v468
        %v693 = vtanh.pop %v469
        %v694 = vtanh.pop %v470
        %v695 = vtanh.pop %v471
        %v696 = vtanh.pop %v472
        %v697 = vtanh.pop %v473
        %v698 = vtanh.pop %v474
        %v699 = vtanh.pop %v475
        %v700 = vtanh.pop %v476
        %v701 = vtanh.pop %v477
        %v702 = vtanh.pop %v478
        %v703 = vtanh.pop %v479
        %v704 = vtanh.pop %v480
        %v705 = vtanh.pop %v481
        %v706 = vtanh.pop %v482
        %v707 = vtanh.pop %v483
        %v708 = vtanh.pop %v484
        %v709 = vtanh.pop %v485
        %v710 = vtanh.pop %v486
        %v711 = vtanh.pop %v487
        %v712 = vtanh.pop %v488
        %v713 = vtanh.pop %v489
        %v714 = vpack.c.bf16 %v683, %v682
        %v715 = vpack.c.bf16 %v685, %v684
        %v716 = vpack.c.bf16 %v687, %v686
        %v717 = vpack.c.bf16 %v689, %v688
        %v718 = vpack.c.bf16 %v691, %v690
        %v719 = vpack.c.bf16 %v693, %v692
        %v720 = vpack.c.bf16 %v695, %v694
        %v721 = vpack.c.bf16 %v697, %v696
        %v722 = vpack.c.bf16 %v699, %v698
        %v723 = vpack.c.bf16 %v701, %v700
        %v724 = vpack.c.bf16 %v703, %v702
        %v725 = vpack.c.bf16 %v705, %v704
        %v726 = vpack.c.bf16 %v707, %v706
        %v727 = vpack.c.bf16 %v709, %v708
        %v728 = vpack.c.bf16 %v711, %v710
        %v729 = vpack.c.bf16 %v713, %v712
        %v730 = vld [vmem:[#allocation8] sm:$0xf]
        %v731 = vld [vmem:[#allocation8 + $0x4] sm:$0xf]
        %v732 = vld [vmem:[#allocation8 + $0x8] sm:$0xf]
        %v733 = vld [vmem:[#allocation8 + $0xc] sm:$0xf]
        %v734 = vld [vmem:[#allocation8 + $0x10] sm:$0xf]
        %v735 = vld [vmem:[#allocation8 + $0x14] sm:$0xf]
        %v736 = vld [vmem:[#allocation8 + $0x18] sm:$0xf]
        %v737 = vld [vmem:[#allocation8 + $0x1c] sm:$0xf]
        %v738 = vld [vmem:[#allocation8 + $0x20] sm:$0xf]
        %v739 = vld [vmem:[#allocation8 + $0x24] sm:$0xf]
        %v740 = vld [vmem:[#allocation8 + $0x28] sm:$0xf]
        %v741 = vld [vmem:[#allocation8 + $0x2c] sm:$0xf]
        %v742 = vld [vmem:[#allocation8 + $0x30] sm:$0xf]
        %v743 = vld [vmem:[#allocation8 + $0x34] sm:$0xf]
        %v744 = vld [vmem:[#allocation8 + $0x38] sm:$0xf]
        %v745 = vld [vmem:[#allocation8 + $0x3c] sm:$0xf]
        %v746 = vtanh.pop %v522
        %v747 = vtanh.pop %v523
        %v748 = vtanh.pop %v524
        %v749 = vtanh.pop %v525
        %v750 = vtanh.pop %v526
        %v751 = vtanh.pop %v527
        %v752 = vtanh.pop %v528
        %v753 = vtanh.pop %v529
        %v754 = vtanh.pop %v530
        %v755 = vtanh.pop %v531
        %v756 = vtanh.pop %v532
        %v757 = vtanh.pop %v533
        %v758 = vtanh.pop %v534
        %v759 = vtanh.pop %v535
        %v760 = vtanh.pop %v536
        %v761 = vtanh.pop %v537
        %v762 = vtanh.pop %v538
        %v763 = vtanh.pop %v539
        %v764 = vtanh.pop %v540
        %v765 = vtanh.pop %v541
        %v766 = vtanh.pop %v542
        %v767 = vtanh.pop %v543
        %v768 = vtanh.pop %v544
        %v769 = vtanh.pop %v545
        %v770 = vtanh.pop %v546
        %v771 = vtanh.pop %v547
        %v772 = vtanh.pop %v548
        %v773 = vtanh.pop %v549
        %v774 = vtanh.pop %v550
        %v775 = vtanh.pop %v551
        %v776 = vtanh.pop %v552
        %v777 = vtanh.pop %v553
        %v778 = vpack.c.bf16 %v747, %v746
        %v779 = vpack.c.bf16 %v749, %v748
        %v780 = vpack.c.bf16 %v751, %v750
        %v781 = vpack.c.bf16 %v753, %v752
        %v782 = vpack.c.bf16 %v755, %v754
        %v783 = vpack.c.bf16 %v757, %v756
        %v784 = vpack.c.bf16 %v759, %v758
        %v785 = vpack.c.bf16 %v761, %v760
        %v786 = vpack.c.bf16 %v763, %v762
        %v787 = vpack.c.bf16 %v765, %v764
        %v788 = vpack.c.bf16 %v767, %v766
        %v789 = vpack.c.bf16 %v769, %v768
        %v790 = vpack.c.bf16 %v771, %v770
        %v791 = vpack.c.bf16 %v773, %v772
        %v792 = vpack.c.bf16 %v775, %v774
        %v793 = vpack.c.bf16 %v777, %v776
        %v794 = vld [vmem:[#allocation8 + $0x40] sm:$0xf]
        %v795 = vld [vmem:[#allocation8 + $0x44] sm:$0xf]
        %v796 = vld [vmem:[#allocation8 + $0x48] sm:$0xf]
        %v797 = vld [vmem:[#allocation8 + $0x4c] sm:$0xf]
        %v798 = vld [vmem:[#allocation8 + $0x50] sm:$0xf]
        %v799 = vld [vmem:[#allocation8 + $0x54] sm:$0xf]
        %v800 = vld [vmem:[#allocation8 + $0x58] sm:$0xf]
        %v801 = vld [vmem:[#allocation8 + $0x5c] sm:$0xf]
        %v802 = vld [vmem:[#allocation8 + $0x60] sm:$0xf]
        %v803 = vld [vmem:[#allocation8 + $0x64] sm:$0xf]
        %v804 = vld [vmem:[#allocation8 + $0x68] sm:$0xf]
        %v805 = vld [vmem:[#allocation8 + $0x6c] sm:$0xf]
        %v806 = vld [vmem:[#allocation8 + $0x70] sm:$0xf]
        %v807 = vld [vmem:[#allocation8 + $0x74] sm:$0xf]
        %v808 = vld [vmem:[#allocation8 + $0x78] sm:$0xf]
        %v809 = vld [vmem:[#allocation8 + $0x7c] sm:$0xf]
        %v826 = vunpack.c.l.b16 %v794
        %v827 = vunpack.c.l.b16 %v795
        %v828 = vunpack.c.l.b16 %v796
        %v829 = vunpack.c.l.b16 %v797
        %v830 = vunpack.c.l.b16 %v798
        %v831 = vunpack.c.l.b16 %v799
        %v832 = vunpack.c.l.b16 %v800
        %v833 = vunpack.c.l.b16 %v801
        %v834 = vunpack.c.l.b16 %v802
        %v835 = vunpack.c.l.b16 %v803
        %v836 = vunpack.c.l.b16 %v804
        %v837 = vunpack.c.l.b16 %v805
        %v838 = vunpack.c.l.b16 %v806
        %v839 = vunpack.c.l.b16 %v807
        %v840 = vunpack.c.l.b16 %v808
        %v841 = vunpack.c.l.b16 %v809
        %v842 = vpack.c.b16 %v827, %v826
        %v843 = vpack.c.b16 %v829, %v828
        %v844 = vpack.c.b16 %v831, %v830
        %v845 = vpack.c.b16 %v833, %v832
        %v846 = vpack.c.b16 %v835, %v834
        %v847 = vpack.c.b16 %v837, %v836
        %v848 = vpack.c.b16 %v839, %v838
        %v849 = vpack.c.b16 %v841, %v840
        %858 = vmatprep.subr.bf16.mxu0 0
        %859 = vmatpush1.bf16.msra.mxu0 %v842
        %860 = vmatprep.subr.bf16.mxu0 0
        %861 = vmatpush1.bf16.msra.mxu0 %v843
        %862 = vmatprep.subr.bf16.mxu0 0
        %863 = vmatpush1.bf16.msra.mxu0 %v844
        %864 = vmatprep.subr.bf16.mxu0 0
        %865 = vmatpush1.bf16.msra.mxu0 %v845
        %866 = vmatprep.subr.bf16.mxu0 0
        %867 = vmatpush1.bf16.msra.mxu0 %v846
        %868 = vmatprep.subr.bf16.mxu0 0
        %869 = vmatpush1.bf16.msra.mxu0 %v847
        %870 = vmatprep.subr.bf16.mxu0 0
        %871 = vmatpush1.bf16.msra.mxu0 %v848
        %872 = vmatprep.subr.bf16.mxu0 0
        %873 = vmatpush1.bf16.msra.mxu0 %v849
        %874 = vmatprep.subr.bf16.mxu0 0
        %875 = vmatpush1.bf16.msra.mxu0 0
        %876 = vmatprep.subr.bf16.mxu0 0
        %877 = vmatpush1.bf16.msra.mxu0 0
        %878 = vmatprep.subr.bf16.mxu0 0
        %879 = vmatpush1.bf16.msra.mxu0 0
        %880 = vmatprep.subr.bf16.mxu0 0
        %881 = vmatpush1.bf16.msra.mxu0 0
        %882 = vmatprep.subr.bf16.mxu0 0
        %883 = vmatpush1.bf16.msra.mxu0 0
        %884 = vmatprep.subr.bf16.mxu0 0
        %885 = vmatpush1.bf16.msra.mxu0 0
        %886 = vmatprep.subr.bf16.mxu0 0
        %887 = vmatpush1.bf16.msra.mxu0 0
        %888 = vmatprep.subr.bf16.mxu0 0
        %889 = vmatpush1.bf16.msra.mxu0 0
        %890 = vmatprep.mubr.bf16.mxu0 0
        %891 = vmatmul.mubr.bf16.gmra.mrb[0].mxu0 %v778
        %v892 = vpop.f32.mrb[0].mxu0
        %v893 = vadd.f32 0.0, %v892
        %v894 = vpop.f32.mrb[0].mxu0
        %v895 = vpop.f32.mrb[0].mxu0
        %v896 = vadd.f32 0.0, %v895
        %v897 = vpop.f32.mrb[0].mxu0
        %898 = vmatprep.mubr.bf16.mxu0 0
        %899 = vmatmul.mubr.bf16.gmra.mrb[0].mxu0 %v779
        %v900 = vpop.f32.mrb[0].mxu0
        %v901 = vadd.f32 0.0, %v900
        %v902 = vpop.f32.mrb[0].mxu0
        %v903 = vpop.f32.mrb[0].mxu0
        %v904 = vadd.f32 0.0, %v903
        %v905 = vpop.f32.mrb[0].mxu0
        %906 = vmatprep.mubr.bf16.mxu0 0
        %907 = vmatmul.mubr.bf16.gmra.mrb[0].mxu0 %v780
        %v908 = vpop.f32.mrb[0].mxu0
        %v909 = vadd.f32 0.0, %v908
        %v910 = vpop.f32.mrb[0].mxu0
        %v911 = vpop.f32.mrb[0].mxu0
        %v912 = vadd.f32 0.0, %v911
        %v913 = vpop.f32.mrb[0].mxu0
        %914 = vmatprep.mubr.bf16.mxu0 0
        %915 = vmatmul.mubr.bf16.gmra.mrb[0].mxu0 %v781
        %v916 = vpop.f32.mrb[0].mxu0
        %v917 = vadd.f32 0.0, %v916
        %v918 = vpop.f32.mrb[0].mxu0
        %v919 = vpop.f32.mrb[0].mxu0
        %v920 = vadd.f32 0.0, %v919
        %v921 = vpop.f32.mrb[0].mxu0
        %922 = vmatprep.mubr.bf16.mxu0 0
        %923 = vmatmul.mubr.bf16.gmra.mrb[0].mxu0 %v782
        %v924 = vpop.f32.mrb[0].mxu0
        %v925 = vadd.f32 0.0, %v924
        %v926 = vpop.f32.mrb[0].mxu0
        %v927 = vpop.f32.mrb[0].mxu0
        %v928 = vadd.f32 0.0, %v927
        %v929 = vpop.f32.mrb[0].mxu0
        %930 = vmatprep.mubr.bf16.mxu0 0
        %931 = vmatmul.mubr.bf16.gmra.mrb[0].mxu0 %v783
        %v932 = vpop.f32.mrb[0].mxu0
        %v933 = vadd.f32 0.0, %v932
        %v934 = vpop.f32.mrb[0].mxu0
        %v935 = vpop.f32.mrb[0].mxu0
        %v936 = vadd.f32 0.0, %v935
        %v937 = vpop.f32.mrb[0].mxu0
        %938 = vmatprep.mubr.bf16.mxu0 0
        %939 = vmatmul.mubr.bf16.gmra.mrb[0].mxu0 %v784
        %v940 = vpop.f32.mrb[0].mxu0
        %v941 = vadd.f32 0.0, %v940
        %v942 = vpop.f32.mrb[0].mxu0
        %v943 = vpop.f32.mrb[0].mxu0
        %v944 = vadd.f32 0.0, %v943
        %v945 = vpop.f32.mrb[0].mxu0
        %946 = vmatprep.mubr.bf16.mxu0 0
        %947 = vmatmul.mubr.bf16.gmra.mrb[0].mxu0 %v785
        %v948 = vpop.f32.mrb[0].mxu0
        %v949 = vadd.f32 0.0, %v948
        %v950 = vpop.f32.mrb[0].mxu0
        %v951 = vpop.f32.mrb[0].mxu0
        %v952 = vadd.f32 0.0, %v951
        %v953 = vpop.f32.mrb[0].mxu0
        %954 = vmatprep.mubr.bf16.mxu0 0
        %955 = vmatmul.mubr.bf16.gmra.mrb[0].mxu0 %v786
        %v956 = vpop.f32.mrb[0].mxu0
        %v957 = vadd.f32 0.0, %v956
        %v958 = vpop.f32.mrb[0].mxu0
        %v959 = vpop.f32.mrb[0].mxu0
        %v960 = vadd.f32 0.0, %v959
        %v961 = vpop.f32.mrb[0].mxu0
        %962 = vmatprep.mubr.bf16.mxu0 0
        %963 = vmatmul.mubr.bf16.gmra.mrb[0].mxu0 %v787
        %v964 = vpop.f32.mrb[0].mxu0
        %v965 = vadd.f32 0.0, %v964
        %v966 = vpop.f32.mrb[0].mxu0
        %v967 = vpop.f32.mrb[0].mxu0
        %v968 = vadd.f32 0.0, %v967
        %v969 = vpop.f32.mrb[0].mxu0
        %970 = vmatprep.mubr.bf16.mxu0 0
        %971 = vmatmul.mubr.bf16.gmra.mrb[0].mxu0 %v788
        %v972 = vpop.f32.mrb[0].mxu0
        %v973 = vadd.f32 0.0, %v972
        %v974 = vpop.f32.mrb[0].mxu0
        %v975 = vpop.f32.mrb[0].mxu0
        %v976 = vadd.f32 0.0, %v975
        %v977 = vpop.f32.mrb[0].mxu0
        %978 = vmatprep.mubr.bf16.mxu0 0
        %979 = vmatmul.mubr.bf16.gmra.mrb[0].mxu0 %v789
        %v980 = vpop.f32.mrb[0].mxu0
        %v981 = vadd.f32 0.0, %v980
        %v982 = vpop.f32.mrb[0].mxu0
        %v983 = vpop.f32.mrb[0].mxu0
        %v984 = vadd.f32 0.0, %v983
        %v985 = vpop.f32.mrb[0].mxu0
        %986 = vmatprep.mubr.bf16.mxu0 0
        %987 = vmatmul.mubr.bf16.gmra.mrb[0].mxu0 %v790
        %v988 = vpop.f32.mrb[0].mxu0
        %v989 = vadd.f32 0.0, %v988
        %v990 = vpop.f32.mrb[0].mxu0
        %v991 = vpop.f32.mrb[0].mxu0
        %v992 = vadd.f32 0.0, %v991
        %v993 = vpop.f32.mrb[0].mxu0
        %994 = vmatprep.mubr.bf16.mxu0 0
        %995 = vmatmul.mubr.bf16.gmra.mrb[0].mxu0 %v791
        %v996 = vpop.f32.mrb[0].mxu0
        %v997 = vadd.f32 0.0, %v996
        %v998 = vpop.f32.mrb[0].mxu0
        %v999 = vpop.f32.mrb[0].mxu0
        %v1000 = vadd.f32 0.0, %v999
        %v1001 = vpop.f32.mrb[0].mxu0
        %1002 = vmatprep.mubr.bf16.mxu0 0
        %1003 = vmatmul.mubr.bf16.gmra.mrb[0].mxu0 %v792
        %v1004 = vpop.f32.mrb[0].mxu0
        %v1005 = vadd.f32 0.0, %v1004
        %v1006 = vpop.f32.mrb[0].mxu0
        %v1007 = vpop.f32.mrb[0].mxu0
        %v1008 = vadd.f32 0.0, %v1007
        %v1009 = vpop.f32.mrb[0].mxu0
        %1010 = vmatprep.mubr.bf16.mxu0 0
        %1011 = vmatmul.mubr.bf16.gmra.mrb[0].mxu0 %v793
        %v1012 = vpop.f32.mrb[0].mxu0
        %v1013 = vadd.f32 0.0, %v1012
        %v1014 = vpop.f32.mrb[0].mxu0
        %v1015 = vpop.f32.mrb[0].mxu0
        %v1016 = vadd.f32 0.0, %v1015
        %v1017 = vpop.f32.mrb[0].mxu0
        %1018 = vdwg.mxu0
        %v1035 = vunpack.c.l.b16 %v730
        %v1036 = vunpack.c.l.b16 %v731
        %v1037 = vunpack.c.l.b16 %v732
        %v1038 = vunpack.c.l.b16 %v733
        %v1039 = vunpack.c.l.b16 %v734
        %v1040 = vunpack.c.l.b16 %v735
        %v1041 = vunpack.c.l.b16 %v736
        %v1042 = vunpack.c.l.b16 %v737
        %v1043 = vunpack.c.l.b16 %v738
        %v1044 = vunpack.c.l.b16 %v739
        %v1045 = vunpack.c.l.b16 %v740
        %v1046 = vunpack.c.l.b16 %v741
        %v1047 = vunpack.c.l.b16 %v742
        %v1048 = vunpack.c.l.b16 %v743
        %v1049 = vunpack.c.l.b16 %v744
        %v1050 = vunpack.c.l.b16 %v745
        %v1051 = vpack.c.b16 %v1036, %v1035
        %v1052 = vpack.c.b16 %v1038, %v1037
        %v1053 = vpack.c.b16 %v1040, %v1039
        %v1054 = vpack.c.b16 %v1042, %v1041
        %v1055 = vpack.c.b16 %v1044, %v1043
        %v1056 = vpack.c.b16 %v1046, %v1045
        %v1057 = vpack.c.b16 %v1048, %v1047
        %v1058 = vpack.c.b16 %v1050, %v1049
        %1067 = vmatprep.subr.bf16.mxu0 0
        %1068 = vmatpush1.bf16.msra.mxu0 %v1051
        %1069 = vmatprep.subr.bf16.mxu0 0
        %1070 = vmatpush1.bf16.msra.mxu0 %v1052
        %1071 = vmatprep.subr.bf16.mxu0 0
        %1072 = vmatpush1.bf16.msra.mxu0 %v1053
        %1073 = vmatprep.subr.bf16.mxu0 0
        %1074 = vmatpush1.bf16.msra.mxu0 %v1054
        %1075 = vmatprep.subr.bf16.mxu0 0
        %1076 = vmatpush1.bf16.msra.mxu0 %v1055
        %1077 = vmatprep.subr.bf16.mxu0 0
        %1078 = vmatpush1.bf16.msra.mxu0 %v1056
        %1079 = vmatprep.subr.bf16.mxu0 0
        %1080 = vmatpush1.bf16.msra.mxu0 %v1057
        %1081 = vmatprep.subr.bf16.mxu0 0
        %1082 = vmatpush1.bf16.msra.mxu0 %v1058
        %1083 = vmatprep.subr.bf16.mxu0 0
        %1084 = vmatpush1.bf16.msra.mxu0 0
        %1085 = vmatprep.subr.bf16.mxu0 0
        %1086 = vmatpush1.bf16.msra.mxu0 0
        %1087 = vmatprep.subr.bf16.mxu0 0
        %1088 = vmatpush1.bf16.msra.mxu0 0
        %1089 = vmatprep.subr.bf16.mxu0 0
        %1090 = vmatpush1.bf16.msra.mxu0 0
        %1091 = vmatprep.subr.bf16.mxu0 0
        %1092 = vmatpush1.bf16.msra.mxu0 0
        %1093 = vmatprep.subr.bf16.mxu0 0
        %1094 = vmatpush1.bf16.msra.mxu0 0
        %1095 = vmatprep.subr.bf16.mxu0 0
        %1096 = vmatpush1.bf16.msra.mxu0 0
        %1097 = vmatprep.subr.bf16.mxu0 0
        %1098 = vmatpush1.bf16.msra.mxu0 0
        %1099 = vmatprep.mubr.bf16.mxu0 0
        %1100 = vmatmul.mubr.bf16.gmra.mrb[0].mxu0 %v714
        %v1101 = vpop.f32.mrb[0].mxu0
        %v1102 = vadd.f32 %v893, %v1101
        %v1103 = vpop.f32.mrb[0].mxu0
        %v1104 = vpop.f32.mrb[0].mxu0
        %v1105 = vadd.f32 %v896, %v1104
        %v1106 = vpop.f32.mrb[0].mxu0
        %1107 = vmatprep.mubr.bf16.mxu0 0
        %1108 = vmatmul.mubr.bf16.gmra.mrb[0].mxu0 %v715
        %v1109 = vpop.f32.mrb[0].mxu0
        %v1110 = vadd.f32 %v901, %v1109
        %v1111 = vpop.f32.mrb[0].mxu0
        %v1112 = vpop.f32.mrb[0].mxu0
        %v1113 = vadd.f32 %v904, %v1112
        %v1114 = vpop.f32.mrb[0].mxu0
        %1115 = vmatprep.mubr.bf16.mxu0 0
        %1116 = vmatmul.mubr.bf16.gmra.mrb[0].mxu0 %v716
        %v1117 = vpop.f32.mrb[0].mxu0
        %v1118 = vadd.f32 %v909, %v1117
        %v1119 = vpop.f32.mrb[0].mxu0
        %v1120 = vpop.f32.mrb[0].mxu0
        %v1121 = vadd.f32 %v912, %v1120
        %v1122 = vpop.f32.mrb[0].mxu0
        %1123 = vmatprep.mubr.bf16.mxu0 0
        %1124 = vmatmul.mubr.bf16.gmra.mrb[0].mxu0 %v717
        %v1125 = vpop.f32.mrb[0].mxu0
        %v1126 = vadd.f32 %v917, %v1125
        %v1127 = vpop.f32.mrb[0].mxu0
        %v1128 = vpop.f32.mrb[0].mxu0
        %v1129 = vadd.f32 %v920, %v1128
        %v1130 = vpop.f32.mrb[0].mxu0
        %1131 = vmatprep.mubr.bf16.mxu0 0
        %1132 = vmatmul.mubr.bf16.gmra.mrb[0].mxu0 %v718
        %v1133 = vpop.f32.mrb[0].mxu0
        %v1134 = vadd.f32 %v925, %v1133
        %v1135 = vpop.f32.mrb[0].mxu0
        %v1136 = vpop.f32.mrb[0].mxu0
        %v1137 = vadd.f32 %v928, %v1136
        %v1138 = vpop.f32.mrb[0].mxu0
        %1139 = vmatprep.mubr.bf16.mxu0 0
        %1140 = vmatmul.mubr.bf16.gmra.mrb[0].mxu0 %v719
        %v1141 = vpop.f32.mrb[0].mxu0
        %v1142 = vadd.f32 %v933, %v1141
        %v1143 = vpop.f32.mrb[0].mxu0
        %v1144 = vpop.f32.mrb[0].mxu0
        %v1145 = vadd.f32 %v936, %v1144
        %v1146 = vpop.f32.mrb[0].mxu0
        %1147 = vmatprep.mubr.bf16.mxu0 0
        %1148 = vmatmul.mubr.bf16.gmra.mrb[0].mxu0 %v720
        %v1149 = vpop.f32.mrb[0].mxu0
        %v1150 = vadd.f32 %v941, %v1149
        %v1151 = vpop.f32.mrb[0].mxu0
        %v1152 = vpop.f32.mrb[0].mxu0
        %v1153 = vadd.f32 %v944, %v1152
        %v1154 = vpop.f32.mrb[0].mxu0
        %1155 = vmatprep.mubr.bf16.mxu0 0
        %1156 = vmatmul.mubr.bf16.gmra.mrb[0].mxu0 %v721
        %v1157 = vpop.f32.mrb[0].mxu0
        %v1158 = vadd.f32 %v949, %v1157
        %v1159 = vpop.f32.mrb[0].mxu0
        %v1160 = vpop.f32.mrb[0].mxu0
        %v1161 = vadd.f32 %v952, %v1160
        %v1162 = vpop.f32.mrb[0].mxu0
        %1163 = vmatprep.mubr.bf16.mxu0 0
        %1164 = vmatmul.mubr.bf16.gmra.mrb[0].mxu0 %v722
        %v1165 = vpop.f32.mrb[0].mxu0
        %v1166 = vadd.f32 %v957, %v1165
        %v1167 = vpop.f32.mrb[0].mxu0
        %v1168 = vpop.f32.mrb[0].mxu0
        %v1169 = vadd.f32 %v960, %v1168
        %v1170 = vpop.f32.mrb[0].mxu0
        %1171 = vmatprep.mubr.bf16.mxu0 0
        %1172 = vmatmul.mubr.bf16.gmra.mrb[0].mxu0 %v723
        %v1173 = vpop.f32.mrb[0].mxu0
        %v1174 = vadd.f32 %v965, %v1173
        %v1175 = vpop.f32.mrb[0].mxu0
        %v1176 = vpop.f32.mrb[0].mxu0
        %v1177 = vadd.f32 %v968, %v1176
        %v1178 = vpop.f32.mrb[0].mxu0
        %1179 = vmatprep.mubr.bf16.mxu0 0
        %1180 = vmatmul.mubr.bf16.gmra.mrb[0].mxu0 %v724
        %v1181 = vpop.f32.mrb[0].mxu0
        %v1182 = vadd.f32 %v973, %v1181
        %v1183 = vpop.f32.mrb[0].mxu0
        %v1184 = vpop.f32.mrb[0].mxu0
        %v1185 = vadd.f32 %v976, %v1184
        %v1186 = vpop.f32.mrb[0].mxu0
        %1187 = vmatprep.mubr.bf16.mxu0 0
        %1188 = vmatmul.mubr.bf16.gmra.mrb[0].mxu0 %v725
        %v1189 = vpop.f32.mrb[0].mxu0
        %v1190 = vadd.f32 %v981, %v1189
        %v1191 = vpop.f32.mrb[0].mxu0
        %v1192 = vpop.f32.mrb[0].mxu0
        %v1193 = vadd.f32 %v984, %v1192
        %v1194 = vpop.f32.mrb[0].mxu0
        %1195 = vmatprep.mubr.bf16.mxu0 0
        %1196 = vmatmul.mubr.bf16.gmra.mrb[0].mxu0 %v726
        %v1197 = vpop.f32.mrb[0].mxu0
        %v1198 = vadd.f32 %v989, %v1197
        %v1199 = vpop.f32.mrb[0].mxu0
        %v1200 = vpop.f32.mrb[0].mxu0
        %v1201 = vadd.f32 %v992, %v1200
        %v1202 = vpop.f32.mrb[0].mxu0
        %1203 = vmatprep.mubr.bf16.mxu0 0
        %1204 = vmatmul.mubr.bf16.gmra.mrb[0].mxu0 %v727
        %v1205 = vpop.f32.mrb[0].mxu0
        %v1206 = vadd.f32 %v997, %v1205
        %v1207 = vpop.f32.mrb[0].mxu0
        %v1208 = vpop.f32.mrb[0].mxu0
        %v1209 = vadd.f32 %v1000, %v1208
        %v1210 = vpop.f32.mrb[0].mxu0
        %1211 = vmatprep.mubr.bf16.mxu0 0
        %1212 = vmatmul.mubr.bf16.gmra.mrb[0].mxu0 %v728
        %v1213 = vpop.f32.mrb[0].mxu0
        %v1214 = vadd.f32 %v1005, %v1213
        %v1215 = vpop.f32.mrb[0].mxu0
        %v1216 = vpop.f32.mrb[0].mxu0
        %v1217 = vadd.f32 %v1008, %v1216
        %v1218 = vpop.f32.mrb[0].mxu0
        %1219 = vmatprep.mubr.bf16.mxu0 0
        %1220 = vmatmul.mubr.bf16.gmra.mrb[0].mxu0 %v729
        %v1221 = vpop.f32.mrb[0].mxu0
        %v1222 = vadd.f32 %v1013, %v1221
        %v1223 = vpop.f32.mrb[0].mxu0
        %v1224 = vpop.f32.mrb[0].mxu0
        %v1225 = vadd.f32 %v1016, %v1224
        %v1226 = vpop.f32.mrb[0].mxu0
        %1227 = vdwg.mxu0
        %v1228 = vtanh.pop %v618
        %v1229 = vtanh.pop %v619
        %v1230 = vtanh.pop %v620
        %v1231 = vtanh.pop %v621
        %v1232 = vtanh.pop %v622
        %v1233 = vtanh.pop %v623
        %v1234 = vtanh.pop %v624
        %v1235 = vtanh.pop %v625
        %v1236 = vtanh.pop %v626
        %v1237 = vtanh.pop %v627
        %v1238 = vtanh.pop %v628
        %v1239 = vtanh.pop %v629
        %v1240 = vtanh.pop %v630
        %v1241 = vtanh.pop %v631
        %v1242 = vtanh.pop %v632
        %v1243 = vtanh.pop %v633
        %v1244 = vtanh.pop %v634
        %v1245 = vtanh.pop %v635
        %v1246 = vtanh.pop %v636
        %v1247 = vtanh.pop %v637
        %v1248 = vtanh.pop %v638
        %v1249 = vtanh.pop %v639
        %v1250 = vtanh.pop %v640
        %v1251 = vtanh.pop %v641
        %v1252 = vtanh.pop %v642
        %v1253 = vtanh.pop %v643
        %v1254 = vtanh.pop %v644
        %v1255 = vtanh.pop %v645
        %v1256 = vtanh.pop %v646
        %v1257 = vtanh.pop %v647
        %v1258 = vtanh.pop %v648
        %v1259 = vtanh.pop %v649
        %v1260 = vpack.c.bf16 %v1229, %v1228
        %v1261 = vpack.c.bf16 %v1231, %v1230
        %v1262 = vpack.c.bf16 %v1233, %v1232
        %v1263 = vpack.c.bf16 %v1235, %v1234
        %v1264 = vpack.c.bf16 %v1237, %v1236
        %v1265 = vpack.c.bf16 %v1239, %v1238
        %v1266 = vpack.c.bf16 %v1241, %v1240
        %v1267 = vpack.c.bf16 %v1243, %v1242
        %v1268 = vpack.c.bf16 %v1245, %v1244
        %v1269 = vpack.c.bf16 %v1247, %v1246
        %v1270 = vpack.c.bf16 %v1249, %v1248
        %v1271 = vpack.c.bf16 %v1251, %v1250
        %v1272 = vpack.c.bf16 %v1253, %v1252
        %v1273 = vpack.c.bf16 %v1255, %v1254
        %v1274 = vpack.c.bf16 %v1257, %v1256
        %v1275 = vpack.c.bf16 %v1259, %v1258
        %v1276 = vld [vmem:[#allocation8 + $0x80] sm:$0xf]
        %v1277 = vld [vmem:[#allocation8 + $0x84] sm:$0xf]
        %v1278 = vld [vmem:[#allocation8 + $0x88] sm:$0xf]
        %v1279 = vld [vmem:[#allocation8 + $0x8c] sm:$0xf]
        %v1280 = vld [vmem:[#allocation8 + $0x90] sm:$0xf]
        %v1281 = vld [vmem:[#allocation8 + $0x94] sm:$0xf]
        %v1282 = vld [vmem:[#allocation8 + $0x98] sm:$0xf]
        %v1283 = vld [vmem:[#allocation8 + $0x9c] sm:$0xf]
        %v1284 = vld [vmem:[#allocation8 + $0xa0] sm:$0xf]
        %v1285 = vld [vmem:[#allocation8 + $0xa4] sm:$0xf]
        %v1286 = vld [vmem:[#allocation8 + $0xa8] sm:$0xf]
        %v1287 = vld [vmem:[#allocation8 + $0xac] sm:$0xf]
        %v1288 = vld [vmem:[#allocation8 + $0xb0] sm:$0xf]
        %v1289 = vld [vmem:[#allocation8 + $0xb4] sm:$0xf]
        %v1290 = vld [vmem:[#allocation8 + $0xb8] sm:$0xf]
        %v1291 = vld [vmem:[#allocation8 + $0xbc] sm:$0xf]
        %v1308 = vunpack.c.l.b16 %v1276
        %v1309 = vunpack.c.l.b16 %v1277
        %v1310 = vunpack.c.l.b16 %v1278
        %v1311 = vunpack.c.l.b16 %v1279
        %v1312 = vunpack.c.l.b16 %v1280
        %v1313 = vunpack.c.l.b16 %v1281
        %v1314 = vunpack.c.l.b16 %v1282
        %v1315 = vunpack.c.l.b16 %v1283
        %v1316 = vunpack.c.l.b16 %v1284
        %v1317 = vunpack.c.l.b16 %v1285
        %v1318 = vunpack.c.l.b16 %v1286
        %v1319 = vunpack.c.l.b16 %v1287
        %v1320 = vunpack.c.l.b16 %v1288
        %v1321 = vunpack.c.l.b16 %v1289
        %v1322 = vunpack.c.l.b16 %v1290
        %v1323 = vunpack.c.l.b16 %v1291
        %v1324 = vpack.c.b16 %v1309, %v1308
        %v1325 = vpack.c.b16 %v1311, %v1310
        %v1326 = vpack.c.b16 %v1313, %v1312
        %v1327 = vpack.c.b16 %v1315, %v1314
        %v1328 = vpack.c.b16 %v1317, %v1316
        %v1329 = vpack.c.b16 %v1319, %v1318
        %v1330 = vpack.c.b16 %v1321, %v1320
        %v1331 = vpack.c.b16 %v1323, %v1322
        %1340 = vmatprep.subr.bf16.mxu0 0
        %1341 = vmatpush1.bf16.msra.mxu0 %v1324
        %1342 = vmatprep.subr.bf16.mxu0 0
        %1343 = vmatpush1.bf16.msra.mxu0 %v1325
        %1344 = vmatprep.subr.bf16.mxu0 0
        %1345 = vmatpush1.bf16.msra.mxu0 %v1326
        %1346 = vmatprep.subr.bf16.mxu0 0
        %1347 = vmatpush1.bf16.msra.mxu0 %v1327
        %1348 = vmatprep.subr.bf16.mxu0 0
        %1349 = vmatpush1.bf16.msra.mxu0 %v1328
        %1350 = vmatprep.subr.bf16.mxu0 0
        %1351 = vmatpush1.bf16.msra.mxu0 %v1329
        %1352 = vmatprep.subr.bf16.mxu0 0
        %1353 = vmatpush1.bf16.msra.mxu0 %v1330
        %1354 = vmatprep.subr.bf16.mxu0 0
        %1355 = vmatpush1.bf16.msra.mxu0 %v1331
        %1356 = vmatprep.subr.bf16.mxu0 0
        %1357 = vmatpush1.bf16.msra.mxu0 0
        %1358 = vmatprep.subr.bf16.mxu0 0
        %1359 = vmatpush1.bf16.msra.mxu0 0
        %1360 = vmatprep.subr.bf16.mxu0 0
        %1361 = vmatpush1.bf16.msra.mxu0 0
        %1362 = vmatprep.subr.bf16.mxu0 0
        %1363 = vmatpush1.bf16.msra.mxu0 0
        %1364 = vmatprep.subr.bf16.mxu0 0
        %1365 = vmatpush1.bf16.msra.mxu0 0
        %1366 = vmatprep.subr.bf16.mxu0 0
        %1367 = vmatpush1.bf16.msra.mxu0 0
        %1368 = vmatprep.subr.bf16.mxu0 0
        %1369 = vmatpush1.bf16.msra.mxu0 0
        %1370 = vmatprep.subr.bf16.mxu0 0
        %1371 = vmatpush1.bf16.msra.mxu0 0
        %1372 = vmatprep.mubr.bf16.mxu0 0
        %1373 = vmatmul.mubr.bf16.gmra.mrb[0].mxu0 %v1260
        %v1374 = vpop.f32.mrb[0].mxu0
        %v1375 = vadd.f32 0.0, %v1374
        %v1376 = vpop.f32.mrb[0].mxu0
        %v1377 = vpop.f32.mrb[0].mxu0
        %v1378 = vadd.f32 0.0, %v1377
        %v1379 = vpop.f32.mrb[0].mxu0
        %1380 = vmatprep.mubr.bf16.mxu0 0
        %1381 = vmatmul.mubr.bf16.gmra.mrb[0].mxu0 %v1261
        %v1382 = vpop.f32.mrb[0].mxu0
        %v1383 = vadd.f32 0.0, %v1382
        %v1384 = vpop.f32.mrb[0].mxu0
        %v1385 = vpop.f32.mrb[0].mxu0
        %v1386 = vadd.f32 0.0, %v1385
        %v1387 = vpop.f32.mrb[0].mxu0
        %1388 = vmatprep.mubr.bf16.mxu0 0
        %1389 = vmatmul.mubr.bf16.gmra.mrb[0].mxu0 %v1262
        %v1390 = vpop.f32.mrb[0].mxu0
        %v1391 = vadd.f32 0.0, %v1390
        %v1392 = vpop.f32.mrb[0].mxu0
        %v1393 = vpop.f32.mrb[0].mxu0
        %v1394 = vadd.f32 0.0, %v1393
        %v1395 = vpop.f32.mrb[0].mxu0
        %1396 = vmatprep.mubr.bf16.mxu0 0
        %1397 = vmatmul.mubr.bf16.gmra.mrb[0].mxu0 %v1263
        %v1398 = vpop.f32.mrb[0].mxu0
        %v1399 = vadd.f32 0.0, %v1398
        %v1400 = vpop.f32.mrb[0].mxu0
        %v1401 = vpop.f32.mrb[0].mxu0
        %v1402 = vadd.f32 0.0, %v1401
        %v1403 = vpop.f32.mrb[0].mxu0
        %1404 = vmatprep.mubr.bf16.mxu0 0
        %1405 = vmatmul.mubr.bf16.gmra.mrb[0].mxu0 %v1264
        %v1406 = vpop.f32.mrb[0].mxu0
        %v1407 = vadd.f32 0.0, %v1406
        %v1408 = vpop.f32.mrb[0].mxu0
        %v1409 = vpop.f32.mrb[0].mxu0
        %v1410 = vadd.f32 0.0, %v1409
        %v1411 = vpop.f32.mrb[0].mxu0
        %1412 = vmatprep.mubr.bf16.mxu0 0
        %1413 = vmatmul.mubr.bf16.gmra.mrb[0].mxu0 %v1265
        %v1414 = vpop.f32.mrb[0].mxu0
        %v1415 = vadd.f32 0.0, %v1414
        %v1416 = vpop.f32.mrb[0].mxu0
        %v1417 = vpop.f32.mrb[0].mxu0
        %v1418 = vadd.f32 0.0, %v1417
        %v1419 = vpop.f32.mrb[0].mxu0
        %1420 = vmatprep.mubr.bf16.mxu0 0
        %1421 = vmatmul.mubr.bf16.gmra.mrb[0].mxu0 %v1266
        %v1422 = vpop.f32.mrb[0].mxu0
        %v1423 = vadd.f32 0.0, %v1422
        %v1424 = vpop.f32.mrb[0].mxu0
        %v1425 = vpop.f32.mrb[0].mxu0
        %v1426 = vadd.f32 0.0, %v1425
        %v1427 = vpop.f32.mrb[0].mxu0
        %1428 = vmatprep.mubr.bf16.mxu0 0
        %1429 = vmatmul.mubr.bf16.gmra.mrb[0].mxu0 %v1267
        %v1430 = vpop.f32.mrb[0].mxu0
        %v1431 = vadd.f32 0.0, %v1430
        %v1432 = vpop.f32.mrb[0].mxu0
        %v1433 = vpop.f32.mrb[0].mxu0
        %v1434 = vadd.f32 0.0, %v1433
        %v1435 = vpop.f32.mrb[0].mxu0
        %1436 = vmatprep.mubr.bf16.mxu0 0
        %1437 = vmatmul.mubr.bf16.gmra.mrb[0].mxu0 %v1268
        %v1438 = vpop.f32.mrb[0].mxu0
        %v1439 = vadd.f32 0.0, %v1438
        %v1440 = vpop.f32.mrb[0].mxu0
        %v1441 = vpop.f32.mrb[0].mxu0
        %v1442 = vadd.f32 0.0, %v1441
        %v1443 = vpop.f32.mrb[0].mxu0
        %1444 = vmatprep.mubr.bf16.mxu0 0
        %1445 = vmatmul.mubr.bf16.gmra.mrb[0].mxu0 %v1269
        %v1446 = vpop.f32.mrb[0].mxu0
        %v1447 = vadd.f32 0.0, %v1446
        %v1448 = vpop.f32.mrb[0].mxu0
        %v1449 = vpop.f32.mrb[0].mxu0
        %v1450 = vadd.f32 0.0, %v1449
        %v1451 = vpop.f32.mrb[0].mxu0
        %1452 = vmatprep.mubr.bf16.mxu0 0
        %1453 = vmatmul.mubr.bf16.gmra.mrb[0].mxu0 %v1270
        %v1454 = vpop.f32.mrb[0].mxu0
        %v1455 = vadd.f32 0.0, %v1454
        %v1456 = vpop.f32.mrb[0].mxu0
        %v1457 = vpop.f32.mrb[0].mxu0
        %v1458 = vadd.f32 0.0, %v1457
        %v1459 = vpop.f32.mrb[0].mxu0
        %1460 = vmatprep.mubr.bf16.mxu0 0
        %1461 = vmatmul.mubr.bf16.gmra.mrb[0].mxu0 %v1271
        %v1462 = vpop.f32.mrb[0].mxu0
        %v1463 = vadd.f32 0.0, %v1462
        %v1464 = vpop.f32.mrb[0].mxu0
        %v1465 = vpop.f32.mrb[0].mxu0
        %v1466 = vadd.f32 0.0, %v1465
        %v1467 = vpop.f32.mrb[0].mxu0
        %1468 = vmatprep.mubr.bf16.mxu0 0
        %1469 = vmatmul.mubr.bf16.gmra.mrb[0].mxu0 %v1272
        %v1470 = vpop.f32.mrb[0].mxu0
        %v1471 = vadd.f32 0.0, %v1470
        %v1472 = vpop.f32.mrb[0].mxu0
        %v1473 = vpop.f32.mrb[0].mxu0
        %v1474 = vadd.f32 0.0, %v1473
        %v1475 = vpop.f32.mrb[0].mxu0
        %1476 = vmatprep.mubr.bf16.mxu0 0
        %1477 = vmatmul.mubr.bf16.gmra.mrb[0].mxu0 %v1273
        %v1478 = vpop.f32.mrb[0].mxu0
        %v1479 = vadd.f32 0.0, %v1478
        %v1480 = vpop.f32.mrb[0].mxu0
        %v1481 = vpop.f32.mrb[0].mxu0
        %v1482 = vadd.f32 0.0, %v1481
        %v1483 = vpop.f32.mrb[0].mxu0
        %1484 = vmatprep.mubr.bf16.mxu0 0
        %1485 = vmatmul.mubr.bf16.gmra.mrb[0].mxu0 %v1274
        %v1486 = vpop.f32.mrb[0].mxu0
        %v1487 = vadd.f32 0.0, %v1486
        %v1488 = vpop.f32.mrb[0].mxu0
        %v1489 = vpop.f32.mrb[0].mxu0
        %v1490 = vadd.f32 0.0, %v1489
        %v1491 = vpop.f32.mrb[0].mxu0
        %1492 = vmatprep.mubr.bf16.mxu0 0
        %1493 = vmatmul.mubr.bf16.gmra.mrb[0].mxu0 %v1275
        %v1494 = vpop.f32.mrb[0].mxu0
        %v1495 = vadd.f32 0.0, %v1494
        %v1496 = vpop.f32.mrb[0].mxu0
        %v1497 = vpop.f32.mrb[0].mxu0
        %v1498 = vadd.f32 0.0, %v1497
        %v1499 = vpop.f32.mrb[0].mxu0
        %1500 = vdwg.mxu0
        %v1501 = vadd.f32 %v1102, %v1375
        %v1502 = vadd.f32 %v1105, %v1378
        %v1503 = vadd.f32 %v1110, %v1383
        %v1504 = vadd.f32 %v1113, %v1386
        %v1505 = vadd.f32 %v1118, %v1391
        %v1506 = vadd.f32 %v1121, %v1394
        %v1507 = vadd.f32 %v1126, %v1399
        %v1508 = vadd.f32 %v1129, %v1402
        %v1509 = vadd.f32 %v1134, %v1407
        %v1510 = vadd.f32 %v1137, %v1410
        %v1511 = vadd.f32 %v1142, %v1415
        %v1512 = vadd.f32 %v1145, %v1418
        %v1513 = vadd.f32 %v1150, %v1423
        %v1514 = vadd.f32 %v1153, %v1426
        %v1515 = vadd.f32 %v1158, %v1431
        %v1516 = vadd.f32 %v1161, %v1434
        %v1517 = vadd.f32 %v1166, %v1439
        %v1518 = vadd.f32 %v1169, %v1442
        %v1519 = vadd.f32 %v1174, %v1447
        %v1520 = vadd.f32 %v1177, %v1450
        %v1521 = vadd.f32 %v1182, %v1455
        %v1522 = vadd.f32 %v1185, %v1458
        %v1523 = vadd.f32 %v1190, %v1463
        %v1524 = vadd.f32 %v1193, %v1466
        %v1525 = vadd.f32 %v1198, %v1471
        %v1526 = vadd.f32 %v1201, %v1474
        %v1527 = vadd.f32 %v1206, %v1479
        %v1528 = vadd.f32 %v1209, %v1482
        %v1529 = vadd.f32 %v1214, %v1487
        %v1530 = vadd.f32 %v1217, %v1490
        %v1531 = vadd.f32 %v1222, %v1495
        %v1532 = vadd.f32 %v1225, %v1498
        %v1533 = vtanh.pop %v650
        %v1534 = vtanh.pop %v651
        %v1535 = vtanh.pop %v652
        %v1536 = vtanh.pop %v653
        %v1537 = vtanh.pop %v654
        %v1538 = vtanh.pop %v655
        %v1539 = vtanh.pop %v656
        %v1540 = vtanh.pop %v657
        %v1541 = vtanh.pop %v658
        %v1542 = vtanh.pop %v659
        %v1543 = vtanh.pop %v660
        %v1544 = vtanh.pop %v661
        %v1545 = vtanh.pop %v662
        %v1546 = vtanh.pop %v663
        %v1547 = vtanh.pop %v664
        %v1548 = vtanh.pop %v665
        %v1549 = vtanh.pop %v666
        %v1550 = vtanh.pop %v667
        %v1551 = vtanh.pop %v668
        %v1552 = vtanh.pop %v669
        %v1553 = vtanh.pop %v670
        %v1554 = vtanh.pop %v671
        %v1555 = vtanh.pop %v672
        %v1556 = vtanh.pop %v673
        %v1557 = vtanh.pop %v674
        %v1558 = vtanh.pop %v675
        %v1559 = vtanh.pop %v676
        %v1560 = vtanh.pop %v677
        %v1561 = vtanh.pop %v678
        %v1562 = vtanh.pop %v679
        %v1563 = vtanh.pop %v680
        %v1564 = vtanh.pop %v681
        %v1565 = vpack.c.bf16 %v1534, %v1533
        %v1566 = vpack.c.bf16 %v1536, %v1535
        %v1567 = vpack.c.bf16 %v1538, %v1537
        %v1568 = vpack.c.bf16 %v1540, %v1539
        %v1569 = vpack.c.bf16 %v1542, %v1541
        %v1570 = vpack.c.bf16 %v1544, %v1543
        %v1571 = vpack.c.bf16 %v1546, %v1545
        %v1572 = vpack.c.bf16 %v1548, %v1547
        %v1573 = vpack.c.bf16 %v1550, %v1549
        %v1574 = vpack.c.bf16 %v1552, %v1551
        %v1575 = vpack.c.bf16 %v1554, %v1553
        %v1576 = vpack.c.bf16 %v1556, %v1555
        %v1577 = vpack.c.bf16 %v1558, %v1557
        %v1578 = vpack.c.bf16 %v1560, %v1559
        %v1579 = vpack.c.bf16 %v1562, %v1561
        %v1580 = vpack.c.bf16 %v1564, %v1563
        %v1581 = vld [vmem:[#allocation8 + $0xc0] sm:$0xf]
        %v1582 = vld [vmem:[#allocation8 + $0xc4] sm:$0xf]
        %v1583 = vld [vmem:[#allocation8 + $0xc8] sm:$0xf]
        %v1584 = vld [vmem:[#allocation8 + $0xcc] sm:$0xf]
        %v1585 = vld [vmem:[#allocation8 + $0xd0] sm:$0xf]
        %v1586 = vld [vmem:[#allocation8 + $0xd4] sm:$0xf]
        %v1587 = vld [vmem:[#allocation8 + $0xd8] sm:$0xf]
        %v1588 = vld [vmem:[#allocation8 + $0xdc] sm:$0xf]
        %v1589 = vld [vmem:[#allocation8 + $0xe0] sm:$0xf]
        %v1590 = vld [vmem:[#allocation8 + $0xe4] sm:$0xf]
        %v1591 = vld [vmem:[#allocation8 + $0xe8] sm:$0xf]
        %v1592 = vld [vmem:[#allocation8 + $0xec] sm:$0xf]
        %v1593 = vld [vmem:[#allocation8 + $0xf0] sm:$0xf]
        %v1594 = vld [vmem:[#allocation8 + $0xf4] sm:$0xf]
        %v1595 = vld [vmem:[#allocation8 + $0xf8] sm:$0xf]
        %v1596 = vld [vmem:[#allocation8 + $0xfc] sm:$0xf]
        %v1613 = vunpack.c.l.b16 %v1581
        %v1614 = vunpack.c.l.b16 %v1582
        %v1615 = vunpack.c.l.b16 %v1583
        %v1616 = vunpack.c.l.b16 %v1584
        %v1617 = vunpack.c.l.b16 %v1585
        %v1618 = vunpack.c.l.b16 %v1586
        %v1619 = vunpack.c.l.b16 %v1587
        %v1620 = vunpack.c.l.b16 %v1588
        %v1621 = vunpack.c.l.b16 %v1589
        %v1622 = vunpack.c.l.b16 %v1590
        %v1623 = vunpack.c.l.b16 %v1591
        %v1624 = vunpack.c.l.b16 %v1592
        %v1625 = vunpack.c.l.b16 %v1593
        %v1626 = vunpack.c.l.b16 %v1594
        %v1627 = vunpack.c.l.b16 %v1595
        %v1628 = vunpack.c.l.b16 %v1596
        %v1629 = vpack.c.b16 %v1614, %v1613
        %v1630 = vpack.c.b16 %v1616, %v1615
        %v1631 = vpack.c.b16 %v1618, %v1617
        %v1632 = vpack.c.b16 %v1620, %v1619
        %v1633 = vpack.c.b16 %v1622, %v1621
        %v1634 = vpack.c.b16 %v1624, %v1623
        %v1635 = vpack.c.b16 %v1626, %v1625
        %v1636 = vpack.c.b16 %v1628, %v1627
        %1645 = vmatprep.subr.bf16.mxu0 0
        %1646 = vmatpush1.bf16.msra.mxu0 %v1629
        %1647 = vmatprep.subr.bf16.mxu0 0
        %1648 = vmatpush1.bf16.msra.mxu0 %v1630
        %1649 = vmatprep.subr.bf16.mxu0 0
        %1650 = vmatpush1.bf16.msra.mxu0 %v1631
        %1651 = vmatprep.subr.bf16.mxu0 0
        %1652 = vmatpush1.bf16.msra.mxu0 %v1632
        %1653 = vmatprep.subr.bf16.mxu0 0
        %1654 = vmatpush1.bf16.msra.mxu0 %v1633
        %1655 = vmatprep.subr.bf16.mxu0 0
        %1656 = vmatpush1.bf16.msra.mxu0 %v1634
        %1657 = vmatprep.subr.bf16.mxu0 0
        %1658 = vmatpush1.bf16.msra.mxu0 %v1635
        %1659 = vmatprep.subr.bf16.mxu0 0
        %1660 = vmatpush1.bf16.msra.mxu0 %v1636
        %1661 = vmatprep.subr.bf16.mxu0 0
        %1662 = vmatpush1.bf16.msra.mxu0 0
        %1663 = vmatprep.subr.bf16.mxu0 0
        %1664 = vmatpush1.bf16.msra.mxu0 0
        %1665 = vmatprep.subr.bf16.mxu0 0
        %1666 = vmatpush1.bf16.msra.mxu0 0
        %1667 = vmatprep.subr.bf16.mxu0 0
        %1668 = vmatpush1.bf16.msra.mxu0 0
        %1669 = vmatprep.subr.bf16.mxu0 0
        %1670 = vmatpush1.bf16.msra.mxu0 0
        %1671 = vmatprep.subr.bf16.mxu0 0
        %1672 = vmatpush1.bf16.msra.mxu0 0
        %1673 = vmatprep.subr.bf16.mxu0 0
        %1674 = vmatpush1.bf16.msra.mxu0 0
        %1675 = vmatprep.subr.bf16.mxu0 0
        %1676 = vmatpush1.bf16.msra.mxu0 0
        %1677 = vmatprep.mubr.bf16.mxu0 0
        %1678 = vmatmul.mubr.bf16.gmra.mrb[0].mxu0 %v1565
        %v1679 = vpop.f32.mrb[0].mxu0
        %v1680 = vadd.f32 0.0, %v1679
        %v1681 = vpop.f32.mrb[0].mxu0
        %v1682 = vpop.f32.mrb[0].mxu0
        %v1683 = vadd.f32 0.0, %v1682
        %v1684 = vpop.f32.mrb[0].mxu0
        %1685 = vmatprep.mubr.bf16.mxu0 0
        %1686 = vmatmul.mubr.bf16.gmra.mrb[0].mxu0 %v1566
        %v1687 = vpop.f32.mrb[0].mxu0
        %v1688 = vadd.f32 0.0, %v1687
        %v1689 = vpop.f32.mrb[0].mxu0
        %v1690 = vpop.f32.mrb[0].mxu0
        %v1691 = vadd.f32 0.0, %v1690
        %v1692 = vpop.f32.mrb[0].mxu0
        %1693 = vmatprep.mubr.bf16.mxu0 0
        %1694 = vmatmul.mubr.bf16.gmra.mrb[0].mxu0 %v1567
        %v1695 = vpop.f32.mrb[0].mxu0
        %v1696 = vadd.f32 0.0, %v1695
        %v1697 = vpop.f32.mrb[0].mxu0
        %v1698 = vpop.f32.mrb[0].mxu0
        %v1699 = vadd.f32 0.0, %v1698
        %v1700 = vpop.f32.mrb[0].mxu0
        %1701 = vmatprep.mubr.bf16.mxu0 0
        %1702 = vmatmul.mubr.bf16.gmra.mrb[0].mxu0 %v1568
        %v1703 = vpop.f32.mrb[0].mxu0
        %v1704 = vadd.f32 0.0, %v1703
        %v1705 = vpop.f32.mrb[0].mxu0
        %v1706 = vpop.f32.mrb[0].mxu0
        %v1707 = vadd.f32 0.0, %v1706
        %v1708 = vpop.f32.mrb[0].mxu0
        %1709 = vmatprep.mubr.bf16.mxu0 0
        %1710 = vmatmul.mubr.bf16.gmra.mrb[0].mxu0 %v1569
        %v1711 = vpop.f32.mrb[0].mxu0
        %v1712 = vadd.f32 0.0, %v1711
        %v1713 = vpop.f32.mrb[0].mxu0
        %v1714 = vpop.f32.mrb[0].mxu0
        %v1715 = vadd.f32 0.0, %v1714
        %v1716 = vpop.f32.mrb[0].mxu0
        %1717 = vmatprep.mubr.bf16.mxu0 0
        %1718 = vmatmul.mubr.bf16.gmra.mrb[0].mxu0 %v1570
        %v1719 = vpop.f32.mrb[0].mxu0
        %v1720 = vadd.f32 0.0, %v1719
        %v1721 = vpop.f32.mrb[0].mxu0
        %v1722 = vpop.f32.mrb[0].mxu0
        %v1723 = vadd.f32 0.0, %v1722
        %v1724 = vpop.f32.mrb[0].mxu0
        %1725 = vmatprep.mubr.bf16.mxu0 0
        %1726 = vmatmul.mubr.bf16.gmra.mrb[0].mxu0 %v1571
        %v1727 = vpop.f32.mrb[0].mxu0
        %v1728 = vadd.f32 0.0, %v1727
        %v1729 = vpop.f32.mrb[0].mxu0
        %v1730 = vpop.f32.mrb[0].mxu0
        %v1731 = vadd.f32 0.0, %v1730
        %v1732 = vpop.f32.mrb[0].mxu0
        %1733 = vmatprep.mubr.bf16.mxu0 0
        %1734 = vmatmul.mubr.bf16.gmra.mrb[0].mxu0 %v1572
        %v1735 = vpop.f32.mrb[0].mxu0
        %v1736 = vadd.f32 0.0, %v1735
        %v1737 = vpop.f32.mrb[0].mxu0
        %v1738 = vpop.f32.mrb[0].mxu0
        %v1739 = vadd.f32 0.0, %v1738
        %v1740 = vpop.f32.mrb[0].mxu0
        %1741 = vmatprep.mubr.bf16.mxu0 0
        %1742 = vmatmul.mubr.bf16.gmra.mrb[0].mxu0 %v1573
        %v1743 = vpop.f32.mrb[0].mxu0
        %v1744 = vadd.f32 0.0, %v1743
        %v1745 = vpop.f32.mrb[0].mxu0
        %v1746 = vpop.f32.mrb[0].mxu0
        %v1747 = vadd.f32 0.0, %v1746
        %v1748 = vpop.f32.mrb[0].mxu0
        %1749 = vmatprep.mubr.bf16.mxu0 0
        %1750 = vmatmul.mubr.bf16.gmra.mrb[0].mxu0 %v1574
        %v1751 = vpop.f32.mrb[0].mxu0
        %v1752 = vadd.f32 0.0, %v1751
        %v1753 = vpop.f32.mrb[0].mxu0
        %v1754 = vpop.f32.mrb[0].mxu0
        %v1755 = vadd.f32 0.0, %v1754
        %v1756 = vpop.f32.mrb[0].mxu0
        %1757 = vmatprep.mubr.bf16.mxu0 0
        %1758 = vmatmul.mubr.bf16.gmra.mrb[0].mxu0 %v1575
        %v1759 = vpop.f32.mrb[0].mxu0
        %v1760 = vadd.f32 0.0, %v1759
        %v1761 = vpop.f32.mrb[0].mxu0
        %v1762 = vpop.f32.mrb[0].mxu0
        %v1763 = vadd.f32 0.0, %v1762
        %v1764 = vpop.f32.mrb[0].mxu0
        %1765 = vmatprep.mubr.bf16.mxu0 0
        %1766 = vmatmul.mubr.bf16.gmra.mrb[0].mxu0 %v1576
        %v1767 = vpop.f32.mrb[0].mxu0
        %v1768 = vadd.f32 0.0, %v1767
        %v1769 = vpop.f32.mrb[0].mxu0
        %v1770 = vpop.f32.mrb[0].mxu0
        %v1771 = vadd.f32 0.0, %v1770
        %v1772 = vpop.f32.mrb[0].mxu0
        %1773 = vmatprep.mubr.bf16.mxu0 0
        %1774 = vmatmul.mubr.bf16.gmra.mrb[0].mxu0 %v1577
        %v1775 = vpop.f32.mrb[0].mxu0
        %v1776 = vadd.f32 0.0, %v1775
        %v1777 = vpop.f32.mrb[0].mxu0
        %v1778 = vpop.f32.mrb[0].mxu0
        %v1779 = vadd.f32 0.0, %v1778
        %v1780 = vpop.f32.mrb[0].mxu0
        %1781 = vmatprep.mubr.bf16.mxu0 0
        %1782 = vmatmul.mubr.bf16.gmra.mrb[0].mxu0 %v1578
        %v1783 = vpop.f32.mrb[0].mxu0
        %v1784 = vadd.f32 0.0, %v1783
        %v1785 = vpop.f32.mrb[0].mxu0
        %v1786 = vpop.f32.mrb[0].mxu0
        %v1787 = vadd.f32 0.0, %v1786
        %v1788 = vpop.f32.mrb[0].mxu0
        %1789 = vmatprep.mubr.bf16.mxu0 0
        %1790 = vmatmul.mubr.bf16.gmra.mrb[0].mxu0 %v1579
        %v1791 = vpop.f32.mrb[0].mxu0
        %v1792 = vadd.f32 0.0, %v1791
        %v1793 = vpop.f32.mrb[0].mxu0
        %v1794 = vpop.f32.mrb[0].mxu0
        %v1795 = vadd.f32 0.0, %v1794
        %v1796 = vpop.f32.mrb[0].mxu0
        %1797 = vmatprep.mubr.bf16.mxu0 0
        %1798 = vmatmul.mubr.bf16.gmra.mrb[0].mxu0 %v1580
        %v1799 = vpop.f32.mrb[0].mxu0
        %v1800 = vadd.f32 0.0, %v1799
        %v1801 = vpop.f32.mrb[0].mxu0
        %v1802 = vpop.f32.mrb[0].mxu0
        %v1803 = vadd.f32 0.0, %v1802
        %v1804 = vpop.f32.mrb[0].mxu0
        %1805 = vdwg.mxu0
        %v1806 = vadd.f32 %v1501, %v1680
        %v1807 = vadd.f32 %v1502, %v1683
        %v1808 = vadd.f32 %v1503, %v1688
        %v1809 = vadd.f32 %v1504, %v1691
        %v1810 = vadd.f32 %v1505, %v1696
        %v1811 = vadd.f32 %v1506, %v1699
        %v1812 = vadd.f32 %v1507, %v1704
        %v1813 = vadd.f32 %v1508, %v1707
        %v1814 = vadd.f32 %v1509, %v1712
        %v1815 = vadd.f32 %v1510, %v1715
        %v1816 = vadd.f32 %v1511, %v1720
        %v1817 = vadd.f32 %v1512, %v1723
        %v1818 = vadd.f32 %v1513, %v1728
        %v1819 = vadd.f32 %v1514, %v1731
        %v1820 = vadd.f32 %v1515, %v1736
        %v1821 = vadd.f32 %v1516, %v1739
        %v1822 = vadd.f32 %v1517, %v1744
        %v1823 = vadd.f32 %v1518, %v1747
        %v1824 = vadd.f32 %v1519, %v1752
        %v1825 = vadd.f32 %v1520, %v1755
        %v1826 = vadd.f32 %v1521, %v1760
        %v1827 = vadd.f32 %v1522, %v1763
        %v1828 = vadd.f32 %v1523, %v1768
        %v1829 = vadd.f32 %v1524, %v1771
        %v1830 = vadd.f32 %v1525, %v1776
        %v1831 = vadd.f32 %v1526, %v1779
        %v1832 = vadd.f32 %v1527, %v1784
        %v1833 = vadd.f32 %v1528, %v1787
        %v1834 = vadd.f32 %v1529, %v1792
        %v1835 = vadd.f32 %v1530, %v1795
        %v1836 = vadd.f32 %v1531, %v1800
        %v1837 = vadd.f32 %v1532, %v1803
        %v1838 = vld [vmem:[%s4] sm:$0x1]
        %v1840 = vlaneseq
        %v1841 = vshrl.u32 %v1840, 7
        %v1842 = vsub.s32 0, %v1841
        %v1843 = vrot.slane %v1838, %v1842
        %v1845 = vadd.f32 %v1806, %v1843
        %v1846 = vadd.f32 %v1807, %v1843
        %v1847 = vadd.f32 %v1808, %v1843
        %v1848 = vadd.f32 %v1809, %v1843
        %v1849 = vadd.f32 %v1810, %v1843
        %v1850 = vadd.f32 %v1811, %v1843
        %v1851 = vadd.f32 %v1812, %v1843
        %v1852 = vadd.f32 %v1813, %v1843
        %v1853 = vadd.f32 %v1814, %v1843
        %v1854 = vadd.f32 %v1815, %v1843
        %v1855 = vadd.f32 %v1816, %v1843
        %v1856 = vadd.f32 %v1817, %v1843
        %v1857 = vadd.f32 %v1818, %v1843
        %v1858 = vadd.f32 %v1819, %v1843
        %v1859 = vadd.f32 %v1820, %v1843
        %v1860 = vadd.f32 %v1821, %v1843
        %v1861 = vadd.f32 %v1822, %v1843
        %v1862 = vadd.f32 %v1823, %v1843
        %v1863 = vadd.f32 %v1824, %v1843
        %v1864 = vadd.f32 %v1825, %v1843
        %v1865 = vadd.f32 %v1826, %v1843
        %v1866 = vadd.f32 %v1827, %v1843
        %v1867 = vadd.f32 %v1828, %v1843
        %v1868 = vadd.f32 %v1829, %v1843
        %v1869 = vadd.f32 %v1830, %v1843
        %v1870 = vadd.f32 %v1831, %v1843
        %v1871 = vadd.f32 %v1832, %v1843
        %v1872 = vadd.f32 %v1833, %v1843
        %v1873 = vadd.f32 %v1834, %v1843
        %v1874 = vadd.f32 %v1835, %v1843
        %v1875 = vadd.f32 %v1836, %v1843
        %v1876 = vadd.f32 %v1837, %v1843
        %v1877 = vtanh.pop %v1845
        %v1878 = vtanh.pop %v1846
        %v1879 = vtanh.pop %v1847
        %v1880 = vtanh.pop %v1848
        %v1881 = vtanh.pop %v1849
        %v1882 = vtanh.pop %v1850
        %v1883 = vtanh.pop %v1851
        %v1884 = vtanh.pop %v1852
        %v1885 = vtanh.pop %v1853
        %v1886 = vtanh.pop %v1854
        %v1887 = vtanh.pop %v1855
        %v1888 = vtanh.pop %v1856
        %v1889 = vtanh.pop %v1857
        %v1890 = vtanh.pop %v1858
        %v1891 = vtanh.pop %v1859
        %v1892 = vtanh.pop %v1860
        %v1893 = vtanh.pop %v1861
        %v1894 = vtanh.pop %v1862
        %v1895 = vtanh.pop %v1863
        %v1896 = vtanh.pop %v1864
        %v1897 = vtanh.pop %v1865
        %v1898 = vtanh.pop %v1866
        %v1899 = vtanh.pop %v1867
        %v1900 = vtanh.pop %v1868
        %v1901 = vtanh.pop %v1869
        %v1902 = vtanh.pop %v1870
        %v1903 = vtanh.pop %v1871
        %v1904 = vtanh.pop %v1872
        %v1905 = vtanh.pop %v1873
        %v1906 = vtanh.pop %v1874
        %v1907 = vtanh.pop %v1875
        %v1908 = vtanh.pop %v1876
        %v1909 = vld [vmem:[%s5] sm:$0xff]
        %v1910 = vld [vmem:[%s5 + $0x8] sm:$0xff]
        %v1911 = vld [vmem:[%s5 + $0x10] sm:$0xff]
        %v1912 = vld [vmem:[%s5 + $0x18] sm:$0xff]
        %v1913 = vld [vmem:[%s5 + $0x20] sm:$0xff]
        %v1914 = vld [vmem:[%s5 + $0x28] sm:$0xff]
        %v1915 = vld [vmem:[%s5 + $0x30] sm:$0xff]
        %v1916 = vld [vmem:[%s5 + $0x38] sm:$0xff]
        %v1917 = vld [vmem:[%s5 + $0x40] sm:$0xff]
        %v1918 = vld [vmem:[%s5 + $0x48] sm:$0xff]
        %v1919 = vld [vmem:[%s5 + $0x50] sm:$0xff]
        %v1920 = vld [vmem:[%s5 + $0x58] sm:$0xff]
        %v1921 = vld [vmem:[%s5 + $0x60] sm:$0xff]
        %v1922 = vld [vmem:[%s5 + $0x68] sm:$0xff]
        %v1923 = vld [vmem:[%s5 + $0x70] sm:$0xff]
        %v1924 = vld [vmem:[%s5 + $0x78] sm:$0xff]
        %v1925 = vld [vmem:[#allocation2] sm:$0x1]
        %v1927 = vlaneseq
        %v1928 = vshrl.u32 %v1927, 7
        %v1929 = vsub.s32 0, %v1928
        %v1930 = vrot.slane %v1925, %v1929
        %1931 = vset.pattern.permute.xlu0 0
        %1932 = vperm.xlu0 %1931, %v1930
        %v1933 = vpop.permute.xlu0 %1932
        %1935 = vmatprep.subr.mxu0 0.0
        %1936 = vmatpush1.msra.mxu0 %v1909
        %1937 = vmatprep.subr.mxu0 0.0
        %1938 = vmatpush1.msra.mxu0 %v1910
        %1939 = vmatprep.subr.mxu0 0.0
        %1940 = vmatpush1.msra.mxu0 %v1911
        %1941 = vmatprep.subr.mxu0 0.0
        %1942 = vmatpush1.msra.mxu0 %v1912
        %1943 = vmatprep.subr.mxu0 0.0
        %1944 = vmatpush1.msra.mxu0 %v1913
        %1945 = vmatprep.subr.mxu0 0.0
        %1946 = vmatpush1.msra.mxu0 %v1914
        %1947 = vmatprep.subr.mxu0 0.0
        %1948 = vmatpush1.msra.mxu0 %v1915
        %1949 = vmatprep.subr.mxu0 0.0
        %1950 = vmatpush1.msra.mxu0 %v1916
        %1951 = vmatprep.subr.mxu0 0.0
        %1952 = vmatpush1.msra.mxu0 %v1917
        %1953 = vmatprep.subr.mxu0 0.0
        %1954 = vmatpush1.msra.mxu0 %v1918
        %1955 = vmatprep.subr.mxu0 0.0
        %1956 = vmatpush1.msra.mxu0 %v1919
        %1957 = vmatprep.subr.mxu0 0.0
        %1958 = vmatpush1.msra.mxu0 %v1920
        %1959 = vmatprep.subr.mxu0 0.0
        %1960 = vmatpush1.msra.mxu0 %v1921
        %1961 = vmatprep.subr.mxu0 0.0
        %1962 = vmatpush1.msra.mxu0 %v1922
        %1963 = vmatprep.subr.mxu0 0.0
        %1964 = vmatpush1.msra.mxu0 %v1923
        %1965 = vmatprep.subr.mxu0 0.0
        %1966 = vmatpush1.msra.mxu0 %v1924
        %1967 = vmatprep.subr.mxu0 0.0
        %1968 = vmatpush1.msra.mxu0 0.0
        %1969 = vmatprep.subr.mxu0 0.0
        %1970 = vmatpush1.msra.mxu0 0.0
        %1971 = vmatprep.subr.mxu0 0.0
        %1972 = vmatpush1.msra.mxu0 0.0
        %1973 = vmatprep.subr.mxu0 0.0
        %1974 = vmatpush1.msra.mxu0 0.0
        %1975 = vmatprep.subr.mxu0 0.0
        %1976 = vmatpush1.msra.mxu0 0.0
        %1977 = vmatprep.subr.mxu0 0.0
        %1978 = vmatpush1.msra.mxu0 0.0
        %1979 = vmatprep.subr.mxu0 0.0
        %1980 = vmatpush1.msra.mxu0 0.0
        %1981 = vmatprep.subr.mxu0 0.0
        %1982 = vmatpush1.msra.mxu0 0.0
        %1983 = vmatprep.subr.mxu0 0.0
        %1984 = vmatpush1.msra.mxu0 0.0
        %1985 = vmatprep.subr.mxu0 0.0
        %1986 = vmatpush1.msra.mxu0 0.0
        %1987 = vmatprep.subr.mxu0 0.0
        %1988 = vmatpush1.msra.mxu0 0.0
        %1989 = vmatprep.subr.mxu0 0.0
        %1990 = vmatpush1.msra.mxu0 0.0
        %1991 = vmatprep.subr.mxu0 0.0
        %1992 = vmatpush1.msra.mxu0 0.0
        %1993 = vmatprep.subr.mxu0 0.0
        %1994 = vmatpush1.msra.mxu0 0.0
        %1995 = vmatprep.subr.mxu0 0.0
        %1996 = vmatpush1.msra.mxu0 0.0
        %1997 = vmatprep.subr.mxu0 0.0
        %1998 = vmatpush1.msra.mxu0 0.0
        %1999 = vmatprep.mubr.f32.mxu0 0.0
        %2000 = vmatmul.mubr.f32.gmra.mrb[0].mxu0 %v1877
        %v2001 = vpop.f32.mrb[0].mxu0
        %v2002 = vadd.f32 %v1933, %v2001
        %v2003 = vpop.f32.mrb[0].mxu0
        %2004 = vmatprep.mubr.f32.mxu0 0.0
        %2005 = vmatmul.mubr.f32.gmra.mrb[0].mxu0 %v1878
        %v2006 = vpop.f32.mrb[0].mxu0
        %v2007 = vadd.f32 %v1933, %v2006
        %v2008 = vpop.f32.mrb[0].mxu0
        %2009 = vmatprep.mubr.f32.mxu0 0.0
        %2010 = vmatmul.mubr.f32.gmra.mrb[0].mxu0 %v1879
        %v2011 = vpop.f32.mrb[0].mxu0
        %v2012 = vadd.f32 %v1933, %v2011
        %v2013 = vpop.f32.mrb[0].mxu0
        %2014 = vmatprep.mubr.f32.mxu0 0.0
        %2015 = vmatmul.mubr.f32.gmra.mrb[0].mxu0 %v1880
        %v2016 = vpop.f32.mrb[0].mxu0
        %v2017 = vadd.f32 %v1933, %v2016
        %v2018 = vpop.f32.mrb[0].mxu0
        %2019 = vmatprep.mubr.f32.mxu0 0.0
        %2020 = vmatmul.mubr.f32.gmra.mrb[0].mxu0 %v1881
        %v2021 = vpop.f32.mrb[0].mxu0
        %v2022 = vadd.f32 %v1933, %v2021
        %v2023 = vpop.f32.mrb[0].mxu0
        %2024 = vmatprep.mubr.f32.mxu0 0.0
        %2025 = vmatmul.mubr.f32.gmra.mrb[0].mxu0 %v1882
        %v2026 = vpop.f32.mrb[0].mxu0
        %v2027 = vadd.f32 %v1933, %v2026
        %v2028 = vpop.f32.mrb[0].mxu0
        %2029 = vmatprep.mubr.f32.mxu0 0.0
        %2030 = vmatmul.mubr.f32.gmra.mrb[0].mxu0 %v1883
        %v2031 = vpop.f32.mrb[0].mxu0
        %v2032 = vadd.f32 %v1933, %v2031
        %v2033 = vpop.f32.mrb[0].mxu0
        %2034 = vmatprep.mubr.f32.mxu0 0.0
        %2035 = vmatmul.mubr.f32.gmra.mrb[0].mxu0 %v1884
        %v2036 = vpop.f32.mrb[0].mxu0
        %v2037 = vadd.f32 %v1933, %v2036
        %v2038 = vpop.f32.mrb[0].mxu0
        %2039 = vmatprep.mubr.f32.mxu0 0.0
        %2040 = vmatmul.mubr.f32.gmra.mrb[0].mxu0 %v1885
        %v2041 = vpop.f32.mrb[0].mxu0
        %v2042 = vadd.f32 %v1933, %v2041
        %v2043 = vpop.f32.mrb[0].mxu0
        %2044 = vmatprep.mubr.f32.mxu0 0.0
        %2045 = vmatmul.mubr.f32.gmra.mrb[0].mxu0 %v1886
        %v2046 = vpop.f32.mrb[0].mxu0
        %v2047 = vadd.f32 %v1933, %v2046
        %v2048 = vpop.f32.mrb[0].mxu0
        %2049 = vmatprep.mubr.f32.mxu0 0.0
        %2050 = vmatmul.mubr.f32.gmra.mrb[0].mxu0 %v1887
        %v2051 = vpop.f32.mrb[0].mxu0
        %v2052 = vadd.f32 %v1933, %v2051
        %v2053 = vpop.f32.mrb[0].mxu0
        %2054 = vmatprep.mubr.f32.mxu0 0.0
        %2055 = vmatmul.mubr.f32.gmra.mrb[0].mxu0 %v1888
        %v2056 = vpop.f32.mrb[0].mxu0
        %v2057 = vadd.f32 %v1933, %v2056
        %v2058 = vpop.f32.mrb[0].mxu0
        %2059 = vmatprep.mubr.f32.mxu0 0.0
        %2060 = vmatmul.mubr.f32.gmra.mrb[0].mxu0 %v1889
        %v2061 = vpop.f32.mrb[0].mxu0
        %v2062 = vadd.f32 %v1933, %v2061
        %v2063 = vpop.f32.mrb[0].mxu0
        %2064 = vmatprep.mubr.f32.mxu0 0.0
        %2065 = vmatmul.mubr.f32.gmra.mrb[0].mxu0 %v1890
        %v2066 = vpop.f32.mrb[0].mxu0
        %v2067 = vadd.f32 %v1933, %v2066
        %v2068 = vpop.f32.mrb[0].mxu0
        %2069 = vmatprep.mubr.f32.mxu0 0.0
        %2070 = vmatmul.mubr.f32.gmra.mrb[0].mxu0 %v1891
        %v2071 = vpop.f32.mrb[0].mxu0
        %v2072 = vadd.f32 %v1933, %v2071
        %v2073 = vpop.f32.mrb[0].mxu0
        %2074 = vmatprep.mubr.f32.mxu0 0.0
        %2075 = vmatmul.mubr.f32.gmra.mrb[0].mxu0 %v1892
        %v2076 = vpop.f32.mrb[0].mxu0
        %v2077 = vadd.f32 %v1933, %v2076
        %v2078 = vpop.f32.mrb[0].mxu0
        %2079 = vmatprep.mubr.f32.mxu0 0.0
        %2080 = vmatmul.mubr.f32.gmra.mrb[0].mxu0 %v1893
        %v2081 = vpop.f32.mrb[0].mxu0
        %v2082 = vadd.f32 %v1933, %v2081
        %v2083 = vpop.f32.mrb[0].mxu0
        %2084 = vmatprep.mubr.f32.mxu0 0.0
        %2085 = vmatmul.mubr.f32.gmra.mrb[0].mxu0 %v1894
        %v2086 = vpop.f32.mrb[0].mxu0
        %v2087 = vadd.f32 %v1933, %v2086
        %v2088 = vpop.f32.mrb[0].mxu0
        %2089 = vmatprep.mubr.f32.mxu0 0.0
        %2090 = vmatmul.mubr.f32.gmra.mrb[0].mxu0 %v1895
        %v2091 = vpop.f32.mrb[0].mxu0
        %v2092 = vadd.f32 %v1933, %v2091
        %v2093 = vpop.f32.mrb[0].mxu0
        %2094 = vmatprep.mubr.f32.mxu0 0.0
        %2095 = vmatmul.mubr.f32.gmra.mrb[0].mxu0 %v1896
        %v2096 = vpop.f32.mrb[0].mxu0
        %v2097 = vadd.f32 %v1933, %v2096
        %v2098 = vpop.f32.mrb[0].mxu0
        %2099 = vmatprep.mubr.f32.mxu0 0.0
        %2100 = vmatmul.mubr.f32.gmra.mrb[0].mxu0 %v1897
        %v2101 = vpop.f32.mrb[0].mxu0
        %v2102 = vadd.f32 %v1933, %v2101
        %v2103 = vpop.f32.mrb[0].mxu0
        %2104 = vmatprep.mubr.f32.mxu0 0.0
        %2105 = vmatmul.mubr.f32.gmra.mrb[0].mxu0 %v1898
        %v2106 = vpop.f32.mrb[0].mxu0
        %v2107 = vadd.f32 %v1933, %v2106
        %v2108 = vpop.f32.mrb[0].mxu0
        %2109 = vmatprep.mubr.f32.mxu0 0.0
        %2110 = vmatmul.mubr.f32.gmra.mrb[0].mxu0 %v1899
        %v2111 = vpop.f32.mrb[0].mxu0
        %v2112 = vadd.f32 %v1933, %v2111
        %v2113 = vpop.f32.mrb[0].mxu0
        %2114 = vmatprep.mubr.f32.mxu0 0.0
        %2115 = vmatmul.mubr.f32.gmra.mrb[0].mxu0 %v1900
        %v2116 = vpop.f32.mrb[0].mxu0
        %v2117 = vadd.f32 %v1933, %v2116
        %v2118 = vpop.f32.mrb[0].mxu0
        %2119 = vmatprep.mubr.f32.mxu0 0.0
        %2120 = vmatmul.mubr.f32.gmra.mrb[0].mxu0 %v1901
        %v2121 = vpop.f32.mrb[0].mxu0
        %v2122 = vadd.f32 %v1933, %v2121
        %v2123 = vpop.f32.mrb[0].mxu0
        %2124 = vmatprep.mubr.f32.mxu0 0.0
        %2125 = vmatmul.mubr.f32.gmra.mrb[0].mxu0 %v1902
        %v2126 = vpop.f32.mrb[0].mxu0
        %v2127 = vadd.f32 %v1933, %v2126
        %v2128 = vpop.f32.mrb[0].mxu0
        %2129 = vmatprep.mubr.f32.mxu0 0.0
        %2130 = vmatmul.mubr.f32.gmra.mrb[0].mxu0 %v1903
        %v2131 = vpop.f32.mrb[0].mxu0
        %v2132 = vadd.f32 %v1933, %v2131
        %v2133 = vpop.f32.mrb[0].mxu0
        %2134 = vmatprep.mubr.f32.mxu0 0.0
        %2135 = vmatmul.mubr.f32.gmra.mrb[0].mxu0 %v1904
        %v2136 = vpop.f32.mrb[0].mxu0
        %v2137 = vadd.f32 %v1933, %v2136
        %v2138 = vpop.f32.mrb[0].mxu0
        %2139 = vmatprep.mubr.f32.mxu0 0.0
        %2140 = vmatmul.mubr.f32.gmra.mrb[0].mxu0 %v1905
        %v2141 = vpop.f32.mrb[0].mxu0
        %v2142 = vadd.f32 %v1933, %v2141
        %v2143 = vpop.f32.mrb[0].mxu0
        %2144 = vmatprep.mubr.f32.mxu0 0.0
        %2145 = vmatmul.mubr.f32.gmra.mrb[0].mxu0 %v1906
        %v2146 = vpop.f32.mrb[0].mxu0
        %v2147 = vadd.f32 %v1933, %v2146
        %v2148 = vpop.f32.mrb[0].mxu0
        %2149 = vmatprep.mubr.f32.mxu0 0.0
        %2150 = vmatmul.mubr.f32.gmra.mrb[0].mxu0 %v1907
        %v2151 = vpop.f32.mrb[0].mxu0
        %v2152 = vadd.f32 %v1933, %v2151
        %v2153 = vpop.f32.mrb[0].mxu0
        %2154 = vmatprep.mubr.f32.mxu0 0.0
        %2155 = vmatmul.mubr.f32.gmra.mrb[0].mxu0 %v1908
        %v2156 = vpop.f32.mrb[0].mxu0
        %v2157 = vadd.f32 %v1933, %v2156
        %v2158 = vpop.f32.mrb[0].mxu0
        %2159 = vdwg.mxu0
        %vm2160 = vcmask 31744
        %2161 = vst.msk [vmem:[%s404] sm:$0xff] %vm2160, %v2002
        %2162 = vst.msk [vmem:[%s404 + $0x8] sm:$0xff] %vm2160, %v2007
        %2163 = vst.msk [vmem:[%s404 + $0x10] sm:$0xff] %vm2160, %v2012
        %2164 = vst.msk [vmem:[%s404 + $0x18] sm:$0xff] %vm2160, %v2017
        %2165 = vst.msk [vmem:[%s404 + $0x20] sm:$0xff] %vm2160, %v2022
        %2166 = vst.msk [vmem:[%s404 + $0x28] sm:$0xff] %vm2160, %v2027
        %2167 = vst.msk [vmem:[%s404 + $0x30] sm:$0xff] %vm2160, %v2032
        %2168 = vst.msk [vmem:[%s404 + $0x38] sm:$0xff] %vm2160, %v2037
        %2169 = vst.msk [vmem:[%s404 + $0x40] sm:$0xff] %vm2160, %v2042
        %2170 = vst.msk [vmem:[%s404 + $0x48] sm:$0xff] %vm2160, %v2047
        %2171 = vst.msk [vmem:[%s404 + $0x50] sm:$0xff] %vm2160, %v2052
        %2172 = vst.msk [vmem:[%s404 + $0x58] sm:$0xff] %vm2160, %v2057
        %2173 = vst.msk [vmem:[%s404 + $0x60] sm:$0xff] %vm2160, %v2062
        %2174 = vst.msk [vmem:[%s404 + $0x68] sm:$0xff] %vm2160, %v2067
        %2175 = vst.msk [vmem:[%s404 + $0x70] sm:$0xff] %vm2160, %v2072
        %2176 = vst.msk [vmem:[%s404 + $0x78] sm:$0xff] %vm2160, %v2077
        %2177 = vst.msk [vmem:[%s404 + $0x80] sm:$0xff] %vm2160, %v2082
        %2178 = vst.msk [vmem:[%s404 + $0x88] sm:$0xff] %vm2160, %v2087
        %2179 = vst.msk [vmem:[%s404 + $0x90] sm:$0xff] %vm2160, %v2092
        %2180 = vst.msk [vmem:[%s404 + $0x98] sm:$0xff] %vm2160, %v2097
        %2181 = vst.msk [vmem:[%s404 + $0xa0] sm:$0xff] %vm2160, %v2102
        %2182 = vst.msk [vmem:[%s404 + $0xa8] sm:$0xff] %vm2160, %v2107
        %2183 = vst.msk [vmem:[%s404 + $0xb0] sm:$0xff] %vm2160, %v2112
        %2184 = vst.msk [vmem:[%s404 + $0xb8] sm:$0xff] %vm2160, %v2117
        %2185 = vst.msk [vmem:[%s404 + $0xc0] sm:$0xff] %vm2160, %v2122
        %2186 = vst.msk [vmem:[%s404 + $0xc8] sm:$0xff] %vm2160, %v2127
        %2187 = vst.msk [vmem:[%s404 + $0xd0] sm:$0xff] %vm2160, %v2132
        %2188 = vst.msk [vmem:[%s404 + $0xd8] sm:$0xff] %vm2160, %v2137
        %2189 = vst.msk [vmem:[%s404 + $0xe0] sm:$0xff] %vm2160, %v2142
        %2190 = vst.msk [vmem:[%s404 + $0xe8] sm:$0xff] %vm2160, %v2147
        %2191 = vst.msk [vmem:[%s404 + $0xf0] sm:$0xff] %vm2160, %v2152
        %2192 = vst.msk [vmem:[%s404 + $0xf8] sm:$0xff] %vm2160, %v2157
        %s2193 = sand.u32 %s197, 1
        %s2194 = sand.u32 %s197, 1
        %s2195 = smul.addr %s2194, 256
        %s2196 = scalar_lea.vmem [#allocation10], %s2195
        // Predicated region
        $region65: #{tpu_custom_call.1} parent=47 // pred_check
          %p2197 = pneg %p207
        $region66: #{tpu_custom_call.1} parent=47 // pred_check_branch
          %2199 = sbr.rel (%p2197) target = $region68
        $region67: #{tpu_custom_call.1} parent=47 // pred_region
          %s2200 = smul.u32 32, %s27
          %s2201 = ssub.s32 79, %s2200
          %p2202 = scmp.lt.s32.totalorder %s2201, 32
          %s2203 = scalar_select %p2202, %s2201, 32
          %s2204 = smul.u32 128, %s2203
          %p2205 = scmp.ne.s32.totalorder 0, %s2204
          %s2206 = smul.addr %s2200, 8
          %s2207 = scalar_lea.vmem %s7, %s2206
          // Predicated region
          $region69: #{tpu_custom_call.1} parent=67 // pred_check
            %p2208 = pneg %p2205
          $region70: #{tpu_custom_call.1} parent=67 // pred_check_branch
            %2210 = sbr.rel (%p2208) target = $region72
          $region71: #{tpu_custom_call.1} parent=67 // pred_region
            // Predicated region
            $region73: #{tpu_custom_call.1} parent=71 // pred_check
              _
            $region74: #{tpu_custom_call.1} parent=71 // pred_check_branch
              %2212 = sbr.rel (0) target = $region76
            $region75: #{tpu_custom_call.1} parent=71 // pred_region
              // Predicated region
              $region95: #{tpu_custom_call.1} parent=75 // pred_check
                _
              $region96: #{tpu_custom_call.1} parent=75 // pred_check_branch
                %2323 = sbr.rel (0) target = $region98
              $region97: #{tpu_custom_call.1} parent=75 // pred_region
                %s2324 = sshrl.u32 %s2203, 5
                // While loop
                $region99: #{tpu_custom_call.1} parent=97 // loop_pre_header
                  _
                $region100: #{tpu_custom_call.1} parent=97 // loop_header
                  %s2326 = sphi 0, %s2328
                  %p2327 = scmp.ge.s32.totalorder %s2326, %s2324
                  %s2331 = sphi 0, %s2400
                  %s2332 = sphi %s2196, %s2403
                  %s2333 = sphi %s2207, %s2404
                $region101: #{tpu_custom_call.1} parent=97 // loop_header_branch
                  %2330 = sbr.rel (%p2327) target = $region105
                $region102: #{tpu_custom_call.1} parent=97 // loop_body
                  %v2334 = vld [vmem:[%s2332] sm:$0xff]
                  %2335 = vst [vmem:[%s2333] sm:$0xff] %v2334
                  %v2336 = vld [vmem:[%s2332 + $0x8] sm:$0xff]
                  %2337 = vst [vmem:[%s2333 + $0x8] sm:$0xff] %v2336
                  %v2338 = vld [vmem:[%s2332 + $0x10] sm:$0xff]
                  %2339 = vst [vmem:[%s2333 + $0x10] sm:$0xff] %v2338
                  %v2340 = vld [vmem:[%s2332 + $0x18] sm:$0xff]
                  %2341 = vst [vmem:[%s2333 + $0x18] sm:$0xff] %v2340
                  %v2342 = vld [vmem:[%s2332 + $0x20] sm:$0xff]
                  %2343 = vst [vmem:[%s2333 + $0x20] sm:$0xff] %v2342
                  %v2344 = vld [vmem:[%s2332 + $0x28] sm:$0xff]
                  %2345 = vst [vmem:[%s2333 + $0x28] sm:$0xff] %v2344
                  %v2346 = vld [vmem:[%s2332 + $0x30] sm:$0xff]
                  %2347 = vst [vmem:[%s2333 + $0x30] sm:$0xff] %v2346
                  %v2348 = vld [vmem:[%s2332 + $0x38] sm:$0xff]
                  %2349 = vst [vmem:[%s2333 + $0x38] sm:$0xff] %v2348
                  %v2350 = vld [vmem:[%s2332 + $0x40] sm:$0xff]
                  %2351 = vst [vmem:[%s2333 + $0x40] sm:$0xff] %v2350
                  %v2352 = vld [vmem:[%s2332 + $0x48] sm:$0xff]
                  %2353 = vst [vmem:[%s2333 + $0x48] sm:$0xff] %v2352
                  %v2354 = vld [vmem:[%s2332 + $0x50] sm:$0xff]
                  %2355 = vst [vmem:[%s2333 + $0x50] sm:$0xff] %v2354
                  %v2356 = vld [vmem:[%s2332 + $0x58] sm:$0xff]
                  %2357 = vst [vmem:[%s2333 + $0x58] sm:$0xff] %v2356
                  %v2358 = vld [vmem:[%s2332 + $0x60] sm:$0xff]
                  %2359 = vst [vmem:[%s2333 + $0x60] sm:$0xff] %v2358
                  %v2360 = vld [vmem:[%s2332 + $0x68] sm:$0xff]
                  %2361 = vst [vmem:[%s2333 + $0x68] sm:$0xff] %v2360
                  %v2362 = vld [vmem:[%s2332 + $0x70] sm:$0xff]
                  %2363 = vst [vmem:[%s2333 + $0x70] sm:$0xff] %v2362
                  %v2364 = vld [vmem:[%s2332 + $0x78] sm:$0xff]
                  %2365 = vst [vmem:[%s2333 + $0x78] sm:$0xff] %v2364
                  %v2366 = vld [vmem:[%s2332 + $0x80] sm:$0xff]
                  %2367 = vst [vmem:[%s2333 + $0x80] sm:$0xff] %v2366
                  %v2368 = vld [vmem:[%s2332 + $0x88] sm:$0xff]
                  %2369 = vst [vmem:[%s2333 + $0x88] sm:$0xff] %v2368
                  %v2370 = vld [vmem:[%s2332 + $0x90] sm:$0xff]
                  %2371 = vst [vmem:[%s2333 + $0x90] sm:$0xff] %v2370
                  %v2372 = vld [vmem:[%s2332 + $0x98] sm:$0xff]
                  %2373 = vst [vmem:[%s2333 + $0x98] sm:$0xff] %v2372
                  %v2374 = vld [vmem:[%s2332 + $0xa0] sm:$0xff]
                  %2375 = vst [vmem:[%s2333 + $0xa0] sm:$0xff] %v2374
                  %v2376 = vld [vmem:[%s2332 + $0xa8] sm:$0xff]
                  %2377 = vst [vmem:[%s2333 + $0xa8] sm:$0xff] %v2376
                  %v2378 = vld [vmem:[%s2332 + $0xb0] sm:$0xff]
                  %2379 = vst [vmem:[%s2333 + $0xb0] sm:$0xff] %v2378
                  %v2380 = vld [vmem:[%s2332 + $0xb8] sm:$0xff]
                  %2381 = vst [vmem:[%s2333 + $0xb8] sm:$0xff] %v2380
                  %v2382 = vld [vmem:[%s2332 + $0xc0] sm:$0xff]
                  %2383 = vst [vmem:[%s2333 + $0xc0] sm:$0xff] %v2382
                  %v2384 = vld [vmem:[%s2332 + $0xc8] sm:$0xff]
                  %2385 = vst [vmem:[%s2333 + $0xc8] sm:$0xff] %v2384
                  %v2386 = vld [vmem:[%s2332 + $0xd0] sm:$0xff]
                  %2387 = vst [vmem:[%s2333 + $0xd0] sm:$0xff] %v2386
                  %v2388 = vld [vmem:[%s2332 + $0xd8] sm:$0xff]
                  %2389 = vst [vmem:[%s2333 + $0xd8] sm:$0xff] %v2388
                  %v2390 = vld [vmem:[%s2332 + $0xe0] sm:$0xff]
                  %2391 = vst [vmem:[%s2333 + $0xe0] sm:$0xff] %v2390
                  %v2392 = vld [vmem:[%s2332 + $0xe8] sm:$0xff]
                  %2393 = vst [vmem:[%s2333 + $0xe8] sm:$0xff] %v2392
                  %v2394 = vld [vmem:[%s2332 + $0xf0] sm:$0xff]
                  %2395 = vst [vmem:[%s2333 + $0xf0] sm:$0xff] %v2394
                  %v2396 = vld [vmem:[%s2332 + $0xf8] sm:$0xff]
                  %2397 = vst [vmem:[%s2333 + $0xf8] sm:$0xff] %v2396
                  %s2398 = sadd.s32 1, %s2331
                  %p2399 = scmp.ge.s32.totalorder %s2398, %s2324
                  %s2400 = scalar_select %p2399, 0, %s2398
                  %s2401 = smul.u32 %s2400, 256
                  %s2402 = smul.u32 %s2400, 256
                  %s2403 = scalar_lea.vmem %s2196, %s2401 [#allocation10]
                  %s2404 = scalar_lea.vmem %s2207, %s2402
                $region103: #{tpu_custom_call.1} parent=97 // loop_footer
                  %s2328 = sadd.s32 %s2326, 1
                $region104: #{tpu_custom_call.1} parent=97 // loop_footer_branch
                  %2325 = sbr.rel target = $region100
                $region105: #{tpu_custom_call.1} parent=97 // loop_exit
                  _
                %s2405 = sshrl.u32 %s2203, 5
                %s2406 = sand.u32 %s2203, 31
                %s2407 = smul.u32 %s2405, 32
                %s2408 = smul.u32 8, %s2407
                %s2409 = scalar_lea.vmem %s2196, %s2408 [#allocation10]
                %s2410 = smul.u32 8, %s2407
                %s2411 = scalar_lea.vmem %s2207, %s2410
                // While loop
                $region106: #{tpu_custom_call.1} parent=97 // loop_pre_header
                  _
                $region107: #{tpu_custom_call.1} parent=97 // loop_header
                  %s2413 = sphi 0, %s2415
                  %p2414 = scmp.ge.s32.totalorder %s2413, %s2406
                  %s2418 = sphi 0, %s2425
                  %s2419 = sphi %s2409, %s2428
                  %s2420 = sphi %s2411, %s2429
                $region108: #{tpu_custom_call.1} parent=97 // loop_header_branch
                  %2417 = sbr.rel (%p2414) target = $region112
                $region109: #{tpu_custom_call.1} parent=97 // loop_body
                  %v2421 = vld [vmem:[%s2419] sm:$0xff]
                  %2422 = vst [vmem:[%s2420] sm:$0xff] %v2421
                  %s2423 = sadd.s32 1, %s2418
                  %p2424 = scmp.ge.s32.totalorder %s2423, %s2406
                  %s2425 = scalar_select %p2424, 0, %s2423
                  %s2426 = smul.u32 %s2425, 8
                  %s2427 = smul.u32 %s2425, 8
                  %s2428 = scalar_lea.vmem %s2409, %s2426 [#allocation10]
                  %s2429 = scalar_lea.vmem %s2411, %s2427
                $region110: #{tpu_custom_call.1} parent=97 // loop_footer
                  %s2415 = sadd.s32 %s2413, 1
                $region111: #{tpu_custom_call.1} parent=97 // loop_footer_branch
                  %2412 = sbr.rel target = $region107
                $region112: #{tpu_custom_call.1} parent=97 // loop_exit
                  _
              $region98: #{tpu_custom_call.1} parent=75 // pred_fallthru
                _
              // Predicated region
              $region113: #{tpu_custom_call.1} parent=75 // pred_check
                _
              $region114: #{tpu_custom_call.1} parent=75 // pred_check_branch
                %2431 = sbr.rel target = $region116
              $region115: #{tpu_custom_call.1} parent=75 // pred_region
                _
              $region116: #{tpu_custom_call.1} parent=75 // pred_fallthru
                _
            $region76: #{tpu_custom_call.1} parent=71 // pred_fallthru
              _
            // Predicated region
            $region77: #{tpu_custom_call.1} parent=71 // pred_check
              _
            $region78: #{tpu_custom_call.1} parent=71 // pred_check_branch
              %2214 = sbr.rel target = $region80
            $region79: #{tpu_custom_call.1} parent=71 // pred_region
              %s2216 = sshrl.u32 %s2203, 5
              // While loop
              $region81: #{tpu_custom_call.1} parent=79 // loop_pre_header
                _
              $region82: #{tpu_custom_call.1} parent=79 // loop_header
                %s2218 = sphi 0, %s2220
                %p2219 = scmp.ge.s32.totalorder %s2218, %s2216
                %s2223 = sphi 0, %s2292
                %s2224 = sphi %s2196, %s2295
                %s2225 = sphi %s2207, %s2296
              $region83: #{tpu_custom_call.1} parent=79 // loop_header_branch
                %2222 = sbr.rel (%p2219) target = $region87
              $region84: #{tpu_custom_call.1} parent=79 // loop_body
                %v2226 = vld [vmem:[%s2224] sm:$0xff]
                %2227 = vst [vmem:[%s2225] sm:$0xff] %v2226
                %v2228 = vld [vmem:[%s2224 + $0x8] sm:$0xff]
                %2229 = vst [vmem:[%s2225 + $0x8] sm:$0xff] %v2228
                %v2230 = vld [vmem:[%s2224 + $0x10] sm:$0xff]
                %2231 = vst [vmem:[%s2225 + $0x10] sm:$0xff] %v2230
                %v2232 = vld [vmem:[%s2224 + $0x18] sm:$0xff]
                %2233 = vst [vmem:[%s2225 + $0x18] sm:$0xff] %v2232
                %v2234 = vld [vmem:[%s2224 + $0x20] sm:$0xff]
                %2235 = vst [vmem:[%s2225 + $0x20] sm:$0xff] %v2234
                %v2236 = vld [vmem:[%s2224 + $0x28] sm:$0xff]
                %2237 = vst [vmem:[%s2225 + $0x28] sm:$0xff] %v2236
                %v2238 = vld [vmem:[%s2224 + $0x30] sm:$0xff]
                %2239 = vst [vmem:[%s2225 + $0x30] sm:$0xff] %v2238
                %v2240 = vld [vmem:[%s2224 + $0x38] sm:$0xff]
                %2241 = vst [vmem:[%s2225 + $0x38] sm:$0xff] %v2240
                %v2242 = vld [vmem:[%s2224 + $0x40] sm:$0xff]
                %2243 = vst [vmem:[%s2225 + $0x40] sm:$0xff] %v2242
                %v2244 = vld [vmem:[%s2224 + $0x48] sm:$0xff]
                %2245 = vst [vmem:[%s2225 + $0x48] sm:$0xff] %v2244
                %v2246 = vld [vmem:[%s2224 + $0x50] sm:$0xff]
                %2247 = vst [vmem:[%s2225 + $0x50] sm:$0xff] %v2246
                %v2248 = vld [vmem:[%s2224 + $0x58] sm:$0xff]
                %2249 = vst [vmem:[%s2225 + $0x58] sm:$0xff] %v2248
                %v2250 = vld [vmem:[%s2224 + $0x60] sm:$0xff]
                %2251 = vst [vmem:[%s2225 + $0x60] sm:$0xff] %v2250
                %v2252 = vld [vmem:[%s2224 + $0x68] sm:$0xff]
                %2253 = vst [vmem:[%s2225 + $0x68] sm:$0xff] %v2252
                %v2254 = vld [vmem:[%s2224 + $0x70] sm:$0xff]
                %2255 = vst [vmem:[%s2225 + $0x70] sm:$0xff] %v2254
                %v2256 = vld [vmem:[%s2224 + $0x78] sm:$0xff]
                %2257 = vst [vmem:[%s2225 + $0x78] sm:$0xff] %v2256
                %v2258 = vld [vmem:[%s2224 + $0x80] sm:$0xff]
                %2259 = vst [vmem:[%s2225 + $0x80] sm:$0xff] %v2258
                %v2260 = vld [vmem:[%s2224 + $0x88] sm:$0xff]
                %2261 = vst [vmem:[%s2225 + $0x88] sm:$0xff] %v2260
                %v2262 = vld [vmem:[%s2224 + $0x90] sm:$0xff]
                %2263 = vst [vmem:[%s2225 + $0x90] sm:$0xff] %v2262
                %v2264 = vld [vmem:[%s2224 + $0x98] sm:$0xff]
                %2265 = vst [vmem:[%s2225 + $0x98] sm:$0xff] %v2264
                %v2266 = vld [vmem:[%s2224 + $0xa0] sm:$0xff]
                %2267 = vst [vmem:[%s2225 + $0xa0] sm:$0xff] %v2266
                %v2268 = vld [vmem:[%s2224 + $0xa8] sm:$0xff]
                %2269 = vst [vmem:[%s2225 + $0xa8] sm:$0xff] %v2268
                %v2270 = vld [vmem:[%s2224 + $0xb0] sm:$0xff]
                %2271 = vst [vmem:[%s2225 + $0xb0] sm:$0xff] %v2270
                %v2272 = vld [vmem:[%s2224 + $0xb8] sm:$0xff]
                %2273 = vst [vmem:[%s2225 + $0xb8] sm:$0xff] %v2272
                %v2274 = vld [vmem:[%s2224 + $0xc0] sm:$0xff]
                %2275 = vst [vmem:[%s2225 + $0xc0] sm:$0xff] %v2274
                %v2276 = vld [vmem:[%s2224 + $0xc8] sm:$0xff]
                %2277 = vst [vmem:[%s2225 + $0xc8] sm:$0xff] %v2276
                %v2278 = vld [vmem:[%s2224 + $0xd0] sm:$0xff]
                %2279 = vst [vmem:[%s2225 + $0xd0] sm:$0xff] %v2278
                %v2280 = vld [vmem:[%s2224 + $0xd8] sm:$0xff]
                %2281 = vst [vmem:[%s2225 + $0xd8] sm:$0xff] %v2280
                %v2282 = vld [vmem:[%s2224 + $0xe0] sm:$0xff]
                %2283 = vst [vmem:[%s2225 + $0xe0] sm:$0xff] %v2282
                %v2284 = vld [vmem:[%s2224 + $0xe8] sm:$0xff]
                %2285 = vst [vmem:[%s2225 + $0xe8] sm:$0xff] %v2284
                %v2286 = vld [vmem:[%s2224 + $0xf0] sm:$0xff]
                %2287 = vst [vmem:[%s2225 + $0xf0] sm:$0xff] %v2286
                %v2288 = vld [vmem:[%s2224 + $0xf8] sm:$0xff]
                %2289 = vst [vmem:[%s2225 + $0xf8] sm:$0xff] %v2288
                %s2290 = sadd.s32 1, %s2223
                %p2291 = scmp.ge.s32.totalorder %s2290, %s2216
                %s2292 = scalar_select %p2291, 0, %s2290
                %s2293 = smul.u32 %s2292, 256
                %s2294 = smul.u32 %s2292, 256
                %s2295 = scalar_lea.vmem %s2196, %s2293 [#allocation10]
                %s2296 = scalar_lea.vmem %s2207, %s2294
              $region85: #{tpu_custom_call.1} parent=79 // loop_footer
                %s2220 = sadd.s32 %s2218, 1
              $region86: #{tpu_custom_call.1} parent=79 // loop_footer_branch
                %2217 = sbr.rel target = $region82
              $region87: #{tpu_custom_call.1} parent=79 // loop_exit
                _
              %s2297 = sshrl.u32 %s2203, 5
              %s2298 = sand.u32 %s2203, 31
              %s2299 = smul.u32 %s2297, 32
              %s2300 = smul.u32 8, %s2299
              %s2301 = scalar_lea.vmem %s2196, %s2300 [#allocation10]
              %s2302 = smul.u32 8, %s2299
              %s2303 = scalar_lea.vmem %s2207, %s2302
              // While loop
              $region88: #{tpu_custom_call.1} parent=79 // loop_pre_header
                _
              $region89: #{tpu_custom_call.1} parent=79 // loop_header
                %s2305 = sphi 0, %s2307
                %p2306 = scmp.ge.s32.totalorder %s2305, %s2298
                %s2310 = sphi 0, %s2317
                %s2311 = sphi %s2301, %s2320
                %s2312 = sphi %s2303, %s2321
              $region90: #{tpu_custom_call.1} parent=79 // loop_header_branch
                %2309 = sbr.rel (%p2306) target = $region94
              $region91: #{tpu_custom_call.1} parent=79 // loop_body
                %v2313 = vld [vmem:[%s2311] sm:$0xff]
                %2314 = vst [vmem:[%s2312] sm:$0xff] %v2313
                %s2315 = sadd.s32 1, %s2310
                %p2316 = scmp.ge.s32.totalorder %s2315, %s2298
                %s2317 = scalar_select %p2316, 0, %s2315
                %s2318 = smul.u32 %s2317, 8
                %s2319 = smul.u32 %s2317, 8
                %s2320 = scalar_lea.vmem %s2301, %s2318 [#allocation10]
                %s2321 = scalar_lea.vmem %s2303, %s2319
              $region92: #{tpu_custom_call.1} parent=79 // loop_footer
                %s2307 = sadd.s32 %s2305, 1
              $region93: #{tpu_custom_call.1} parent=79 // loop_footer_branch
                %2304 = sbr.rel target = $region89
              $region94: #{tpu_custom_call.1} parent=79 // loop_exit
                _
            $region80: #{tpu_custom_call.1} parent=71 // pred_fallthru
              _
          $region72: #{tpu_custom_call.1} parent=67 // pred_fallthru
            _
          %2432 = vnop
        $region68: #{tpu_custom_call.1} parent=47 // pred_fallthru
          _
      $region48: #{tpu_custom_call.1} parent=5 // pred_fallthru
        _
      %p2433 = scmp.le.s32.totalorder 2, %s22
      // Predicated region
      $region117: #{tpu_custom_call.1} parent=5 // pred_check
        %p2434 = pneg %p2433
      $region118: #{tpu_custom_call.1} parent=5 // pred_check_branch
        %2436 = sbr.rel (%p2434) target = $region120
      $region119: #{tpu_custom_call.1} parent=5 // pred_region
        %s2437 = ssub.s32 %s22, 2
        // Predicated region
        $region121: #{tpu_custom_call.1} parent=119 // pred_check
          %p2438 = pneg %p213
        $region122: #{tpu_custom_call.1} parent=119 // pred_check_branch
          %2440 = sbr.rel (%p2438) target = $region124
        $region123: #{tpu_custom_call.1} parent=119 // pred_region
          %s2441 = sand.u32 %s198, 1
          %s2442 = sand.u32 %s198, 1
          %s2443 = smul.addr %s2442, 256
          %s2444 = scalar_lea.vmem [#allocation10], %s2443
        $region124: #{tpu_custom_call.1} parent=119 // pred_fallthru
          _
      $region120: #{tpu_custom_call.1} parent=5 // pred_fallthru
        _
    $region6: #{tpu_custom_call.1} parent=1 // loop_footer
      %s26 = sadd.s32 1, %s22
    $region7: #{tpu_custom_call.1} parent=1 // loop_footer_branch
      %21 = sbr.rel target = $region3
    $region8: #{tpu_custom_call.1} parent=1 // loop_exit
      _
    %2445 = vsyncpa [#allocation4], 1
    %s2446 = scalar_lea.sflag [#allocation4], 1
    %2447 = vsyncpa %s2446, 1
    %2448 = vsyncpa [#allocation6], 1
    %s2449 = scalar_lea.sflag [#allocation6], 1
    %2450 = vsyncpa %s2449, 1
    %2451 = vsyncpa [#allocation9], 1

</llo_original>
